<compile_context>
chip_gen: v5e
topology: v5e:2x2
jax: 0.10.0
libtpu: 0.0.40
codegen_flags: <defaults>
</compile_context>

<pallas_src>
import functools

import jax
import jax.numpy as jnp
from jax.experimental import pallas as pl
from jax.experimental.pallas import tpu as pltpu


def _make_lstm_kernel(num_layers: int, hidden_size: int, seq_len: int,
                      batch_pad: int):
    H = hidden_size
    T = seq_len
    Bp = batch_pad

    def kernel(x_ref,        # (T*Bp, Din)  bf16  time-major, batch-padded input
               wih0_ref,     # (Din, 4H)    bf16  layer-0 input weights  [i,f,o,g]
               whh0_ref,     # (H, 4H)      bf16  layer-0 hidden weights [i,f,o,g]
               b0_ref,       # (1, 4H)      f32   layer-0 combined bias  [i,f,o,g]
               wih_r_ref,    # (Lr, H, 4H)  bf16  layers >= 1 input weights
               whh_r_ref,    # (Lr, H, 4H)  bf16  layers >= 1 hidden weights
               b_r_ref,      # (Lr, 1, 4H)  f32   layers >= 1 combined biases
               wfc_ref,      # (H, O)       bf16  fc weight (transposed)
               bfc_ref,      # (1, O)       f32   fc bias
               out_ref,      # (Bp, O)      f32   final output (padded batch)
               xw_ref,       # scratch (T*Bp, 4H) f32: per-layer x @ W_ih + b
               seq_ref):     # scratch (T*Bp, H)  f32: per-layer hidden sequence

        def run_recurrence(read_whh, store_seq):
            """Time loop. The input projection (incl. bias) already lives in
            xw_ref, so only the h @ W_hh matmul and the gate math remain on the
            serial critical path."""

            def step(t, carry):
                h, c = carry
                r = pl.multiple_of(t * Bp, Bp)       # sublane-aligned row start
                # Stream the (H,4H) bf16 weight from VMEM each step instead of
                # pinning it in vregs across the whole loop (matters at large H).
                gates = xw_ref[pl.ds(r, Bp), :] + jnp.dot(
                    h.astype(jnp.bfloat16), read_whh(),
                    preferred_element_type=jnp.float32)
                # Gate order [i, f, o, g]: one sigmoid over a contiguous 3H
                # block + one tanh over the trailing H block (2 EUP launches).
                sio = jax.nn.sigmoid(gates[:, :3 * H])
                g = jnp.tanh(gates[:, 3 * H:])
                i = sio[:, 0 * H:1 * H]
                f = sio[:, 1 * H:2 * H]
                o = sio[:, 2 * H:3 * H]
                c_new = f * c + i * g
                h_new = o * jnp.tanh(c_new)
                if store_seq:                        # input to the next layer
                    seq_ref[pl.ds(r, Bp), :] = h_new
                return (h_new, c_new)

            h0 = jnp.zeros((Bp, H), jnp.float32)
            c0 = jnp.zeros((Bp, H), jnp.float32)
            # Short fixed trip count: fully unroll so the scheduler can overlap
            # the next step's W_hh push with this step's gate math.
            h_last, _ = jax.lax.fori_loop(0, T, step, (h0, c0), unroll=True)
            return h_last

        # ---- Layer 0: one big (T*Bp, Din) @ (Din, 4H) input projection, with
        # the bias folded in so it disappears from the time loop entirely. ----
        xw_ref[...] = jnp.dot(x_ref[...], wih0_ref[...],
                              preferred_element_type=jnp.float32) + b0_ref[...]
        h_last = run_recurrence(lambda: whh0_ref[...],
                                store_seq=num_layers > 1)

        # ---- Layers >= 1: previous layer's hidden sequence -> one big matmul ----
        for layer in range(1, num_layers):
            xw_ref[...] = jnp.dot(seq_ref[...].astype(jnp.bfloat16),
                                  wih_r_ref[layer - 1],
                                  preferred_element_type=jnp.float32
                                  ) + b_r_ref[layer - 1]
            h_last = run_recurrence(lambda l=layer: whh_r_ref[l - 1],
                                    store_seq=layer < num_layers - 1)

        # ---- Final linear layer on the last timestep's hidden state ----
        # TODO(synk): pad O to 128 lanes if the fc output ever becomes
        # per-timestep; a single masked store here is negligible.
        out = jnp.dot(h_last.astype(jnp.bfloat16), wfc_ref[...],
                      preferred_element_type=jnp.float32) + bfc_ref[...]
        out_ref[...] = out.astype(out_ref.dtype)

    return kernel


class LSTMNetworkPallas:
    """Pallas-TPU equivalent of the PyTorch LSTM_Network forward pass."""

    def __init__(self, input_size, hidden_size, num_layers, output_size, key):
        self.input_size = input_size
        self.hidden_size = hidden_size
        self.num_layers = num_layers
        self.output_size = output_size

        H, D, L, O = hidden_size, input_size, num_layers, output_size
        k = 1.0 / jnp.sqrt(jnp.float32(H))
        keys = jax.random.split(key, 4 * L + 2)

        def u(kk, shape):
            return jax.random.uniform(kk, shape, jnp.float32, -k, k)

        # PyTorch-style per-layer params (weight_ih: (4H, in), weight_hh: (4H, H)),
        # gate order [i, f, g, o] -- kept in f32 for the pure-JAX reference.
        self.w_ih, self.w_hh, self.b_ih, self.b_hh = [], [], [], []
        for layer in range(L):
            in_dim = D if layer == 0 else H
            self.w_ih.append(u(keys[4 * layer + 0], (4 * H, in_dim)))
            self.w_hh.append(u(keys[4 * layer + 1], (4 * H, H)))
            self.b_ih.append(u(keys[4 * layer + 2], (4 * H,)))
            self.b_hh.append(u(keys[4 * layer + 3], (4 * H,)))
        self.w_fc = u(keys[-2], (O, H))
        self.b_fc = u(keys[-1], (O,))

        # Kernel-friendly copies: gate columns reordered to [i, f, o, g],
        # transposed for plain x @ W matmuls, weights cast to bf16 (MXU-native),
        # biases combined (b_ih + b_hh) and kept in f32.
        perm = jnp.concatenate([jnp.arange(0 * H, 1 * H),
                                jnp.arange(1 * H, 2 * H),
                                jnp.arange(3 * H, 4 * H),
                                jnp.arange(2 * H, 3 * H)])

        def prep_w(w):                       # (4H, in) -> (in, 4H) bf16
            return w[perm, :].T.astype(jnp.bfloat16)

        def prep_b(bi, bh):                  # -> (1, 4H) f32
            return (bi + bh)[perm][None, :]

        self._wih0 = prep_w(self.w_ih[0])                       # (D, 4H)
        self._whh0 = prep_w(self.w_hh[0])                       # (H, 4H)
        self._b0 = prep_b(self.b_ih[0], self.b_hh[0])           # (1, 4H)
        if L > 1:
            self._wih_r = jnp.stack([prep_w(w) for w in self.w_ih[1:]])
            self._whh_r = jnp.stack([prep_w(w) for w in self.w_hh[1:]])
            self._b_r = jnp.stack([prep_b(bi, bh) for bi, bh in
                                   zip(self.b_ih[1:], self.b_hh[1:])])
        else:
            self._wih_r = jnp.zeros((1, H, 4 * H), jnp.bfloat16)
            self._whh_r = jnp.zeros((1, H, 4 * H), jnp.bfloat16)
            self._b_r = jnp.zeros((1, 1, 4 * H), jnp.float32)
        self._wfc = self.w_fc.T.astype(jnp.bfloat16)            # (H, O)
        self._bfc = self.b_fc[None, :]                          # (1, O)

    @functools.partial(jax.jit, static_argnums=0)
    def __call__(self, x):
        # x: (B, T, input_size), batch_first like PyTorch.
        B, T, D = x.shape
        H, O = self.hidden_size, self.output_size
        Bp = ((B + 7) // 8) * 8     # sublane-dense padded batch

        # time-major, batch-pad, flatten to a lane/sublane-dense 2-D bf16 slab.
        x_tm = jnp.transpose(x, (1, 0, 2)).astype(jnp.float32)   # (T, B, D)
        x_tm = jnp.pad(x_tm, ((0, 0), (0, Bp - B), (0, 0)))      # (T, Bp, D)
        x2d = x_tm.reshape(T * Bp, D).astype(jnp.bfloat16)       # (T*Bp, D)

        kernel = _make_lstm_kernel(self.num_layers, H, T, Bp)
        out = pl.pallas_call(
            kernel,
            out_shape=jax.ShapeDtypeStruct((Bp, O), jnp.float32),
            in_specs=[pl.BlockSpec(memory_space=pltpu.MemorySpace.VMEM)] * 9,
            out_specs=pl.BlockSpec(memory_space=pltpu.MemorySpace.VMEM),
            scratch_shapes=[
                pltpu.VMEM((T * Bp, 4 * H), jnp.float32),   # x @ W_ih + b
                pltpu.VMEM((T * Bp, H), jnp.float32),       # inter-layer h seq
            ],
            compiler_params=pltpu.CompilerParams(
                vmem_limit_bytes=64 * 1024 * 1024),
        )(x2d, self._wih0, self._whh0, self._b0,
          self._wih_r, self._whh_r, self._b_r,
          self._wfc, self._bfc)
        # TODO(synk): at large B/T, split the batch across a ("parallel",) grid
        # (uses both v7x TensorCores) and stream x / xw / seq in T-chunks so the
        # working set stays inside v7x's 64 MiB VMEM.
        return out[:B]


def _reference_forward(model, x):
    """Pure-JAX f32 reference matching PyTorch nn.LSTM + Linear semantics."""
    H = model.hidden_size
    B = x.shape[0]
    seq = x.astype(jnp.float32)
    for layer in range(model.num_layers):
        w_ih, w_hh = model.w_ih[layer], model.w_hh[layer]
        b = model.b_ih[layer] + model.b_hh[layer]

        def step(carry, x_t):
            h, c = carry
            gates = x_t @ w_ih.T + h @ w_hh.T + b
            i = jax.nn.sigmoid(gates[:, 0 * H:1 * H])
            f = jax.nn.sigmoid(gates[:, 1 * H:2 * H])
            g = jnp.tanh(gates[:, 2 * H:3 * H])
            o = jax.nn.sigmoid(gates[:, 3 * H:4 * H])
            c = f * c + i * g
            h = o * jnp.tanh(c)
            return (h, c), h

        h0 = jnp.zeros((B, H), jnp.float32)
        c0 = jnp.zeros((B, H), jnp.float32)
        _, hs = jax.lax.scan(step, (h0, c0), jnp.transpose(seq, (1, 0, 2)))
        seq = jnp.transpose(hs, (1, 0, 2))
    return seq[:, -1, :] @ model.w_fc.T + model.b_fc


if __name__ == "__main__":
    key = jax.random.PRNGKey(0)
    k_param, k_x = jax.random.split(key)

    B, T = 2, 8
    input_size, hidden_size, num_layers, output_size = 16, 32, 2, 4

    model = LSTMNetworkPallas(input_size, hidden_size, num_layers, output_size, k_param)
    x = jax.random.normal(k_x, (B, T, input_size), jnp.float32)

    out = model(x)
    out = jax.block_until_ready(out)

    ref = _reference_forward(model, x)
    assert out.shape == (B, output_size)
    # bf16 MXU operands vs f32 reference -> loosened tolerance.
    assert jnp.allclose(out, ref, atol=5e-2, rtol=5e-2), "mismatch vs JAX reference"

    print("KERNEL_OK")
</pallas_src>

<mosaic_0001>
module attributes {stable_mosaic.version = 11 : i64} {
  func.func @kernel(%arg0: memref<64x16xbf16, #tpu.memory_space<vmem>>, %arg1: memref<16x128xbf16, #tpu.memory_space<vmem>>, %arg2: memref<32x128xbf16, #tpu.memory_space<vmem>>, %arg3: memref<1x128xf32, #tpu.memory_space<vmem>>, %arg4: memref<1x32x128xbf16, #tpu.memory_space<vmem>>, %arg5: memref<1x32x128xbf16, #tpu.memory_space<vmem>>, %arg6: memref<1x1x128xf32, #tpu.memory_space<vmem>>, %arg7: memref<32x4xbf16, #tpu.memory_space<vmem>>, %arg8: memref<1x4xf32, #tpu.memory_space<vmem>>, %arg9: memref<8x4xf32, #tpu.memory_space<vmem>>, %arg10: memref<64x128xf32, #tpu.memory_space<vmem>>, %arg11: memref<64x32xf32, #tpu.memory_space<vmem>>) attributes {dimension_semantics = [], scalar_prefetch = 0 : i64, scratch_operands = 2 : i64, tpu.core_type = #tpu.core_type<tc>} {
    %c0 = arith.constant 0 : index
    %c0_0 = arith.constant 0 : index
    %0 = vector.load %arg0[%c0, %c0_0] : memref<64x16xbf16, #tpu.memory_space<vmem>>, vector<64x16xbf16>
    %c0_1 = arith.constant 0 : index
    %c0_2 = arith.constant 0 : index
    %1 = vector.load %arg1[%c0_1, %c0_2] : memref<16x128xbf16, #tpu.memory_space<vmem>>, vector<16x128xbf16>
    %cst = arith.constant dense<0.000000e+00> : vector<64x128xf32>
    %2 = tpu.matmul %0, %1, %cst {dimension_numbers = #tpu.dot_dimension_numbers<[1], [0], [0], [1], [0, 0, 1, 1], [], []>} : vector<64x16xbf16>, vector<16x128xbf16>, vector<64x128xf32> -> vector<64x128xf32>
    %c0_3 = arith.constant 0 : index
    %c0_4 = arith.constant 0 : index
    %3 = vector.load %arg3[%c0_3, %c0_4] : memref<1x128xf32, #tpu.memory_space<vmem>>, vector<1x128xf32>
    %4 = vector.broadcast %3 : vector<1x128xf32> to vector<64x128xf32>
    %5 = arith.addf %2, %4 : vector<64x128xf32>
    %c0_5 = arith.constant 0 : index
    %c0_6 = arith.constant 0 : index
    %6 = vector.load %arg10[%c0_5, %c0_6] : memref<64x128xf32, #tpu.memory_space<vmem>>, vector<64x128xf32>
    tpu.vector_store %arg10[%c0_5, %c0_6], %5 {strides = array<i32>} : memref<64x128xf32, #tpu.memory_space<vmem>>, vector<64x128xf32>,
    %cst_7 = arith.constant 0.000000e+00 : f32
    %7 = vector.broadcast %cst_7 : f32 to vector<8x32xf32>
    %cst_8 = arith.constant 0.000000e+00 : f32
    %8 = vector.broadcast %cst_8 : f32 to vector<8x32xf32>
    %c0_i32 = arith.constant 0 : i32
    %c8_i32 = arith.constant 8 : i32
    %9 = arith.muli %c0_i32, %c8_i32 : i32
    %10 = tpu.assume_multiple %9, 8 : i32
    %11 = arith.index_cast %10 : i32 to index
    %c0_9 = arith.constant 0 : index
    %12 = vector.load %arg10[%11, %c0_9] : memref<64x128xf32, #tpu.memory_space<vmem>>, vector<8x128xf32>
    %13 = arith.truncf %7 : vector<8x32xf32> to vector<8x32xbf16>
    %c0_10 = arith.constant 0 : index
    %c0_11 = arith.constant 0 : index
    %14 = vector.load %arg2[%c0_10, %c0_11] : memref<32x128xbf16, #tpu.memory_space<vmem>>, vector<32x128xbf16>
    %cst_12 = arith.constant dense<0.000000e+00> : vector<8x128xf32>
    %15 = tpu.matmul %13, %14, %cst_12 {dimension_numbers = #tpu.dot_dimension_numbers<[1], [0], [0], [1], [0, 0, 1, 1], [], []>} : vector<8x32xbf16>, vector<32x128xbf16>, vector<8x128xf32> -> vector<8x128xf32>
    %16 = arith.addf %12, %15 : vector<8x128xf32>
    %17 = vector.extract_strided_slice %16 {offsets = [0, 0], sizes = [8, 96], strides = [1, 1]} : vector<8x128xf32> to vector<8x96xf32>
    %18 = arith.negf %17 : vector<8x96xf32>
    %19 = math.exp %18 : vector<8x96xf32>
    %cst_13 = arith.constant 1.000000e+00 : f32
    %20 = vector.broadcast %cst_13 : f32 to vector<8x96xf32>
    %21 = arith.addf %20, %19 : vector<8x96xf32>
    %22 = arith.divf %20, %21 : vector<8x96xf32>
    %23 = vector.extract_strided_slice %16 {offsets = [0, 96], sizes = [8, 32], strides = [1, 1]} : vector<8x128xf32> to vector<8x32xf32>
    %24 = math.tanh %23 : vector<8x32xf32>
    %25 = vector.extract_strided_slice %22 {offsets = [0, 0], sizes = [8, 32], strides = [1, 1]} : vector<8x96xf32> to vector<8x32xf32>
    %26 = vector.extract_strided_slice %22 {offsets = [0, 32], sizes = [8, 32], strides = [1, 1]} : vector<8x96xf32> to vector<8x32xf32>
    %27 = vector.extract_strided_slice %22 {offsets = [0, 64], sizes = [8, 32], strides = [1, 1]} : vector<8x96xf32> to vector<8x32xf32>
    %28 = arith.mulf %26, %8 : vector<8x32xf32>
    %29 = arith.mulf %25, %24 : vector<8x32xf32>
    %30 = arith.addf %28, %29 : vector<8x32xf32>
    %31 = math.tanh %30 : vector<8x32xf32>
    %32 = arith.mulf %27, %31 : vector<8x32xf32>
    %33 = arith.index_cast %10 : i32 to index
    %c0_14 = arith.constant 0 : index
    %34 = vector.load %arg11[%33, %c0_14] : memref<64x32xf32, #tpu.memory_space<vmem>>, vector<8x32xf32>
    tpu.vector_store %arg11[%33, %c0_14], %32 {strides = array<i32>} : memref<64x32xf32, #tpu.memory_space<vmem>>, vector<8x32xf32>,
    %c1_i32 = arith.constant 1 : i32
    %c8_i32_15 = arith.constant 8 : i32
    %35 = arith.muli %c1_i32, %c8_i32_15 : i32
    %36 = tpu.assume_multiple %35, 8 : i32
    %37 = arith.index_cast %36 : i32 to index
    %c0_16 = arith.constant 0 : index
    %38 = vector.load %arg10[%37, %c0_16] : memref<64x128xf32, #tpu.memory_space<vmem>>, vector<8x128xf32>
    %39 = arith.truncf %32 : vector<8x32xf32> to vector<8x32xbf16>
    %c0_17 = arith.constant 0 : index
    %c0_18 = arith.constant 0 : index
    %40 = vector.load %arg2[%c0_17, %c0_18] : memref<32x128xbf16, #tpu.memory_space<vmem>>, vector<32x128xbf16>
    %cst_19 = arith.constant dense<0.000000e+00> : vector<8x128xf32>
    %41 = tpu.matmul %39, %40, %cst_19 {dimension_numbers = #tpu.dot_dimension_numbers<[1], [0], [0], [1], [0, 0, 1, 1], [], []>} : vector<8x32xbf16>, vector<32x128xbf16>, vector<8x128xf32> -> vector<8x128xf32>
    %42 = arith.addf %38, %41 : vector<8x128xf32>
    %43 = vector.extract_strided_slice %42 {offsets = [0, 0], sizes = [8, 96], strides = [1, 1]} : vector<8x128xf32> to vector<8x96xf32>
    %44 = arith.negf %43 : vector<8x96xf32>
    %45 = math.exp %44 : vector<8x96xf32>
    %cst_20 = arith.constant 1.000000e+00 : f32
    %46 = vector.broadcast %cst_20 : f32 to vector<8x96xf32>
    %47 = arith.addf %46, %45 : vector<8x96xf32>
    %48 = arith.divf %46, %47 : vector<8x96xf32>
    %49 = vector.extract_strided_slice %42 {offsets = [0, 96], sizes = [8, 32], strides = [1, 1]} : vector<8x128xf32> to vector<8x32xf32>
    %50 = math.tanh %49 : vector<8x32xf32>
    %51 = vector.extract_strided_slice %48 {offsets = [0, 0], sizes = [8, 32], strides = [1, 1]} : vector<8x96xf32> to vector<8x32xf32>
    %52 = vector.extract_strided_slice %48 {offsets = [0, 32], sizes = [8, 32], strides = [1, 1]} : vector<8x96xf32> to vector<8x32xf32>
    %53 = vector.extract_strided_slice %48 {offsets = [0, 64], sizes = [8, 32], strides = [1, 1]} : vector<8x96xf32> to vector<8x32xf32>
    %54 = arith.mulf %52, %30 : vector<8x32xf32>
    %55 = arith.mulf %51, %50 : vector<8x32xf32>
    %56 = arith.addf %54, %55 : vector<8x32xf32>
    %57 = math.tanh %56 : vector<8x32xf32>
    %58 = arith.mulf %53, %57 : vector<8x32xf32>
    %59 = arith.index_cast %36 : i32 to index
    %c0_21 = arith.constant 0 : index
    %60 = vector.load %arg11[%59, %c0_21] : memref<64x32xf32, #tpu.memory_space<vmem>>, vector<8x32xf32>
    tpu.vector_store %arg11[%59, %c0_21], %58 {strides = array<i32>} : memref<64x32xf32, #tpu.memory_space<vmem>>, vector<8x32xf32>,
    %c2_i32 = arith.constant 2 : i32
    %c8_i32_22 = arith.constant 8 : i32
    %61 = arith.muli %c2_i32, %c8_i32_22 : i32
    %62 = tpu.assume_multiple %61, 8 : i32
    %63 = arith.index_cast %62 : i32 to index
    %c0_23 = arith.constant 0 : index
    %64 = vector.load %arg10[%63, %c0_23] : memref<64x128xf32, #tpu.memory_space<vmem>>, vector<8x128xf32>
    %65 = arith.truncf %58 : vector<8x32xf32> to vector<8x32xbf16>
    %c0_24 = arith.constant 0 : index
    %c0_25 = arith.constant 0 : index
    %66 = vector.load %arg2[%c0_24, %c0_25] : memref<32x128xbf16, #tpu.memory_space<vmem>>, vector<32x128xbf16>
    %cst_26 = arith.constant dense<0.000000e+00> : vector<8x128xf32>
    %67 = tpu.matmul %65, %66, %cst_26 {dimension_numbers = #tpu.dot_dimension_numbers<[1], [0], [0], [1], [0, 0, 1, 1], [], []>} : vector<8x32xbf16>, vector<32x128xbf16>, vector<8x128xf32> -> vector<8x128xf32>
    %68 = arith.addf %64, %67 : vector<8x128xf32>
    %69 = vector.extract_strided_slice %68 {offsets = [0, 0], sizes = [8, 96], strides = [1, 1]} : vector<8x128xf32> to vector<8x96xf32>
    %70 = arith.negf %69 : vector<8x96xf32>
    %71 = math.exp %70 : vector<8x96xf32>
    %cst_27 = arith.constant 1.000000e+00 : f32
    %72 = vector.broadcast %cst_27 : f32 to vector<8x96xf32>
    %73 = arith.addf %72, %71 : vector<8x96xf32>
    %74 = arith.divf %72, %73 : vector<8x96xf32>
    %75 = vector.extract_strided_slice %68 {offsets = [0, 96], sizes = [8, 32], strides = [1, 1]} : vector<8x128xf32> to vector<8x32xf32>
    %76 = math.tanh %75 : vector<8x32xf32>
    %77 = vector.extract_strided_slice %74 {offsets = [0, 0], sizes = [8, 32], strides = [1, 1]} : vector<8x96xf32> to vector<8x32xf32>
    %78 = vector.extract_strided_slice %74 {offsets = [0, 32], sizes = [8, 32], strides = [1, 1]} : vector<8x96xf32> to vector<8x32xf32>
    %79 = vector.extract_strided_slice %74 {offsets = [0, 64], sizes = [8, 32], strides = [1, 1]} : vector<8x96xf32> to vector<8x32xf32>
    %80 = arith.mulf %78, %56 : vector<8x32xf32>
    %81 = arith.mulf %77, %76 : vector<8x32xf32>
    %82 = arith.addf %80, %81 : vector<8x32xf32>
    %83 = math.tanh %82 : vector<8x32xf32>
    %84 = arith.mulf %79, %83 : vector<8x32xf32>
    %85 = arith.index_cast %62 : i32 to index
    %c0_28 = arith.constant 0 : index
    %86 = vector.load %arg11[%85, %c0_28] : memref<64x32xf32, #tpu.memory_space<vmem>>, vector<8x32xf32>
    tpu.vector_store %arg11[%85, %c0_28], %84 {strides = array<i32>} : memref<64x32xf32, #tpu.memory_space<vmem>>, vector<8x32xf32>,
    %c3_i32 = arith.constant 3 : i32
    %c8_i32_29 = arith.constant 8 : i32
    %87 = arith.muli %c3_i32, %c8_i32_29 : i32
    %88 = tpu.assume_multiple %87, 8 : i32
    %89 = arith.index_cast %88 : i32 to index
    %c0_30 = arith.constant 0 : index
    %90 = vector.load %arg10[%89, %c0_30] : memref<64x128xf32, #tpu.memory_space<vmem>>, vector<8x128xf32>
    %91 = arith.truncf %84 : vector<8x32xf32> to vector<8x32xbf16>
    %c0_31 = arith.constant 0 : index
    %c0_32 = arith.constant 0 : index
    %92 = vector.load %arg2[%c0_31, %c0_32] : memref<32x128xbf16, #tpu.memory_space<vmem>>, vector<32x128xbf16>
    %cst_33 = arith.constant dense<0.000000e+00> : vector<8x128xf32>
    %93 = tpu.matmul %91, %92, %cst_33 {dimension_numbers = #tpu.dot_dimension_numbers<[1], [0], [0], [1], [0, 0, 1, 1], [], []>} : vector<8x32xbf16>, vector<32x128xbf16>, vector<8x128xf32> -> vector<8x128xf32>
    %94 = arith.addf %90, %93 : vector<8x128xf32>
    %95 = vector.extract_strided_slice %94 {offsets = [0, 0], sizes = [8, 96], strides = [1, 1]} : vector<8x128xf32> to vector<8x96xf32>
    %96 = arith.negf %95 : vector<8x96xf32>
    %97 = math.exp %96 : vector<8x96xf32>
    %cst_34 = arith.constant 1.000000e+00 : f32
    %98 = vector.broadcast %cst_34 : f32 to vector<8x96xf32>
    %99 = arith.addf %98, %97 : vector<8x96xf32>
    %100 = arith.divf %98, %99 : vector<8x96xf32>
    %101 = vector.extract_strided_slice %94 {offsets = [0, 96], sizes = [8, 32], strides = [1, 1]} : vector<8x128xf32> to vector<8x32xf32>
    %102 = math.tanh %101 : vector<8x32xf32>
    %103 = vector.extract_strided_slice %100 {offsets = [0, 0], sizes = [8, 32], strides = [1, 1]} : vector<8x96xf32> to vector<8x32xf32>
    %104 = vector.extract_strided_slice %100 {offsets = [0, 32], sizes = [8, 32], strides = [1, 1]} : vector<8x96xf32> to vector<8x32xf32>
    %105 = vector.extract_strided_slice %100 {offsets = [0, 64], sizes = [8, 32], strides = [1, 1]} : vector<8x96xf32> to vector<8x32xf32>
    %106 = arith.mulf %104, %82 : vector<8x32xf32>
    %107 = arith.mulf %103, %102 : vector<8x32xf32>
    %108 = arith.addf %106, %107 : vector<8x32xf32>
    %109 = math.tanh %108 : vector<8x32xf32>
    %110 = arith.mulf %105, %109 : vector<8x32xf32>
    %111 = arith.index_cast %88 : i32 to index
    %c0_35 = arith.constant 0 : index
    %112 = vector.load %arg11[%111, %c0_35] : memref<64x32xf32, #tpu.memory_space<vmem>>, vector<8x32xf32>
    tpu.vector_store %arg11[%111, %c0_35], %110 {strides = array<i32>} : memref<64x32xf32, #tpu.memory_space<vmem>>, vector<8x32xf32>,
    %c4_i32 = arith.constant 4 : i32
    %c8_i32_36 = arith.constant 8 : i32
    %113 = arith.muli %c4_i32, %c8_i32_36 : i32
    %114 = tpu.assume_multiple %113, 8 : i32
    %115 = arith.index_cast %114 : i32 to index
    %c0_37 = arith.constant 0 : index
    %116 = vector.load %arg10[%115, %c0_37] : memref<64x128xf32, #tpu.memory_space<vmem>>, vector<8x128xf32>
    %117 = arith.truncf %110 : vector<8x32xf32> to vector<8x32xbf16>
    %c0_38 = arith.constant 0 : index
    %c0_39 = arith.constant 0 : index
    %118 = vector.load %arg2[%c0_38, %c0_39] : memref<32x128xbf16, #tpu.memory_space<vmem>>, vector<32x128xbf16>
    %cst_40 = arith.constant dense<0.000000e+00> : vector<8x128xf32>
    %119 = tpu.matmul %117, %118, %cst_40 {dimension_numbers = #tpu.dot_dimension_numbers<[1], [0], [0], [1], [0, 0, 1, 1], [], []>} : vector<8x32xbf16>, vector<32x128xbf16>, vector<8x128xf32> -> vector<8x128xf32>
    %120 = arith.addf %116, %119 : vector<8x128xf32>
    %121 = vector.extract_strided_slice %120 {offsets = [0, 0], sizes = [8, 96], strides = [1, 1]} : vector<8x128xf32> to vector<8x96xf32>
    %122 = arith.negf %121 : vector<8x96xf32>
    %123 = math.exp %122 : vector<8x96xf32>
    %cst_41 = arith.constant 1.000000e+00 : f32
    %124 = vector.broadcast %cst_41 : f32 to vector<8x96xf32>
    %125 = arith.addf %124, %123 : vector<8x96xf32>
    %126 = arith.divf %124, %125 : vector<8x96xf32>
    %127 = vector.extract_strided_slice %120 {offsets = [0, 96], sizes = [8, 32], strides = [1, 1]} : vector<8x128xf32> to vector<8x32xf32>
    %128 = math.tanh %127 : vector<8x32xf32>
    %129 = vector.extract_strided_slice %126 {offsets = [0, 0], sizes = [8, 32], strides = [1, 1]} : vector<8x96xf32> to vector<8x32xf32>
    %130 = vector.extract_strided_slice %126 {offsets = [0, 32], sizes = [8, 32], strides = [1, 1]} : vector<8x96xf32> to vector<8x32xf32>
    %131 = vector.extract_strided_slice %126 {offsets = [0, 64], sizes = [8, 32], strides = [1, 1]} : vector<8x96xf32> to vector<8x32xf32>
    %132 = arith.mulf %130, %108 : vector<8x32xf32>
    %133 = arith.mulf %129, %128 : vector<8x32xf32>
    %134 = arith.addf %132, %133 : vector<8x32xf32>
    %135 = math.tanh %134 : vector<8x32xf32>
    %136 = arith.mulf %131, %135 : vector<8x32xf32>
    %137 = arith.index_cast %114 : i32 to index
    %c0_42 = arith.constant 0 : index
    %138 = vector.load %arg11[%137, %c0_42] : memref<64x32xf32, #tpu.memory_space<vmem>>, vector<8x32xf32>
    tpu.vector_store %arg11[%137, %c0_42], %136 {strides = array<i32>} : memref<64x32xf32, #tpu.memory_space<vmem>>, vector<8x32xf32>,
    %c5_i32 = arith.constant 5 : i32
    %c8_i32_43 = arith.constant 8 : i32
    %139 = arith.muli %c5_i32, %c8_i32_43 : i32
    %140 = tpu.assume_multiple %139, 8 : i32
    %141 = arith.index_cast %140 : i32 to index
    %c0_44 = arith.constant 0 : index
    %142 = vector.load %arg10[%141, %c0_44] : memref<64x128xf32, #tpu.memory_space<vmem>>, vector<8x128xf32>
    %143 = arith.truncf %136 : vector<8x32xf32> to vector<8x32xbf16>
    %c0_45 = arith.constant 0 : index
    %c0_46 = arith.constant 0 : index
    %144 = vector.load %arg2[%c0_45, %c0_46] : memref<32x128xbf16, #tpu.memory_space<vmem>>, vector<32x128xbf16>
    %cst_47 = arith.constant dense<0.000000e+00> : vector<8x128xf32>
    %145 = tpu.matmul %143, %144, %cst_47 {dimension_numbers = #tpu.dot_dimension_numbers<[1], [0], [0], [1], [0, 0, 1, 1], [], []>} : vector<8x32xbf16>, vector<32x128xbf16>, vector<8x128xf32> -> vector<8x128xf32>
    %146 = arith.addf %142, %145 : vector<8x128xf32>
    %147 = vector.extract_strided_slice %146 {offsets = [0, 0], sizes = [8, 96], strides = [1, 1]} : vector<8x128xf32> to vector<8x96xf32>
    %148 = arith.negf %147 : vector<8x96xf32>
    %149 = math.exp %148 : vector<8x96xf32>
    %cst_48 = arith.constant 1.000000e+00 : f32
    %150 = vector.broadcast %cst_48 : f32 to vector<8x96xf32>
    %151 = arith.addf %150, %149 : vector<8x96xf32>
    %152 = arith.divf %150, %151 : vector<8x96xf32>
    %153 = vector.extract_strided_slice %146 {offsets = [0, 96], sizes = [8, 32], strides = [1, 1]} : vector<8x128xf32> to vector<8x32xf32>
    %154 = math.tanh %153 : vector<8x32xf32>
    %155 = vector.extract_strided_slice %152 {offsets = [0, 0], sizes = [8, 32], strides = [1, 1]} : vector<8x96xf32> to vector<8x32xf32>
    %156 = vector.extract_strided_slice %152 {offsets = [0, 32], sizes = [8, 32], strides = [1, 1]} : vector<8x96xf32> to vector<8x32xf32>
    %157 = vector.extract_strided_slice %152 {offsets = [0, 64], sizes = [8, 32], strides = [1, 1]} : vector<8x96xf32> to vector<8x32xf32>
    %158 = arith.mulf %156, %134 : vector<8x32xf32>
    %159 = arith.mulf %155, %154 : vector<8x32xf32>
    %160 = arith.addf %158, %159 : vector<8x32xf32>
    %161 = math.tanh %160 : vector<8x32xf32>
    %162 = arith.mulf %157, %161 : vector<8x32xf32>
    %163 = arith.index_cast %140 : i32 to index
    %c0_49 = arith.constant 0 : index
    %164 = vector.load %arg11[%163, %c0_49] : memref<64x32xf32, #tpu.memory_space<vmem>>, vector<8x32xf32>
    tpu.vector_store %arg11[%163, %c0_49], %162 {strides = array<i32>} : memref<64x32xf32, #tpu.memory_space<vmem>>, vector<8x32xf32>,
    %c6_i32 = arith.constant 6 : i32
    %c8_i32_50 = arith.constant 8 : i32
    %165 = arith.muli %c6_i32, %c8_i32_50 : i32
    %166 = tpu.assume_multiple %165, 8 : i32
    %167 = arith.index_cast %166 : i32 to index
    %c0_51 = arith.constant 0 : index
    %168 = vector.load %arg10[%167, %c0_51] : memref<64x128xf32, #tpu.memory_space<vmem>>, vector<8x128xf32>
    %169 = arith.truncf %162 : vector<8x32xf32> to vector<8x32xbf16>
    %c0_52 = arith.constant 0 : index
    %c0_53 = arith.constant 0 : index
    %170 = vector.load %arg2[%c0_52, %c0_53] : memref<32x128xbf16, #tpu.memory_space<vmem>>, vector<32x128xbf16>
    %cst_54 = arith.constant dense<0.000000e+00> : vector<8x128xf32>
    %171 = tpu.matmul %169, %170, %cst_54 {dimension_numbers = #tpu.dot_dimension_numbers<[1], [0], [0], [1], [0, 0, 1, 1], [], []>} : vector<8x32xbf16>, vector<32x128xbf16>, vector<8x128xf32> -> vector<8x128xf32>
    %172 = arith.addf %168, %171 : vector<8x128xf32>
    %173 = vector.extract_strided_slice %172 {offsets = [0, 0], sizes = [8, 96], strides = [1, 1]} : vector<8x128xf32> to vector<8x96xf32>
    %174 = arith.negf %173 : vector<8x96xf32>
    %175 = math.exp %174 : vector<8x96xf32>
    %cst_55 = arith.constant 1.000000e+00 : f32
    %176 = vector.broadcast %cst_55 : f32 to vector<8x96xf32>
    %177 = arith.addf %176, %175 : vector<8x96xf32>
    %178 = arith.divf %176, %177 : vector<8x96xf32>
    %179 = vector.extract_strided_slice %172 {offsets = [0, 96], sizes = [8, 32], strides = [1, 1]} : vector<8x128xf32> to vector<8x32xf32>
    %180 = math.tanh %179 : vector<8x32xf32>
    %181 = vector.extract_strided_slice %178 {offsets = [0, 0], sizes = [8, 32], strides = [1, 1]} : vector<8x96xf32> to vector<8x32xf32>
    %182 = vector.extract_strided_slice %178 {offsets = [0, 32], sizes = [8, 32], strides = [1, 1]} : vector<8x96xf32> to vector<8x32xf32>
    %183 = vector.extract_strided_slice %178 {offsets = [0, 64], sizes = [8, 32], strides = [1, 1]} : vector<8x96xf32> to vector<8x32xf32>
    %184 = arith.mulf %182, %160 : vector<8x32xf32>
    %185 = arith.mulf %181, %180 : vector<8x32xf32>
    %186 = arith.addf %184, %185 : vector<8x32xf32>
    %187 = math.tanh %186 : vector<8x32xf32>
    %188 = arith.mulf %183, %187 : vector<8x32xf32>
    %189 = arith.index_cast %166 : i32 to index
    %c0_56 = arith.constant 0 : index
    %190 = vector.load %arg11[%189, %c0_56] : memref<64x32xf32, #tpu.memory_space<vmem>>, vector<8x32xf32>
    tpu.vector_store %arg11[%189, %c0_56], %188 {strides = array<i32>} : memref<64x32xf32, #tpu.memory_space<vmem>>, vector<8x32xf32>,
    %c7_i32 = arith.constant 7 : i32
    %c8_i32_57 = arith.constant 8 : i32
    %191 = arith.muli %c7_i32, %c8_i32_57 : i32
    %192 = tpu.assume_multiple %191, 8 : i32
    %193 = arith.index_cast %192 : i32 to index
    %c0_58 = arith.constant 0 : index
    %194 = vector.load %arg10[%193, %c0_58] : memref<64x128xf32, #tpu.memory_space<vmem>>, vector<8x128xf32>
    %195 = arith.truncf %188 : vector<8x32xf32> to vector<8x32xbf16>
    %c0_59 = arith.constant 0 : index
    %c0_60 = arith.constant 0 : index
    %196 = vector.load %arg2[%c0_59, %c0_60] : memref<32x128xbf16, #tpu.memory_space<vmem>>, vector<32x128xbf16>
    %cst_61 = arith.constant dense<0.000000e+00> : vector<8x128xf32>
    %197 = tpu.matmul %195, %196, %cst_61 {dimension_numbers = #tpu.dot_dimension_numbers<[1], [0], [0], [1], [0, 0, 1, 1], [], []>} : vector<8x32xbf16>, vector<32x128xbf16>, vector<8x128xf32> -> vector<8x128xf32>
    %198 = arith.addf %194, %197 : vector<8x128xf32>
    %199 = vector.extract_strided_slice %198 {offsets = [0, 0], sizes = [8, 96], strides = [1, 1]} : vector<8x128xf32> to vector<8x96xf32>
    %200 = arith.negf %199 : vector<8x96xf32>
    %201 = math.exp %200 : vector<8x96xf32>
    %cst_62 = arith.constant 1.000000e+00 : f32
    %202 = vector.broadcast %cst_62 : f32 to vector<8x96xf32>
    %203 = arith.addf %202, %201 : vector<8x96xf32>
    %204 = arith.divf %202, %203 : vector<8x96xf32>
    %205 = vector.extract_strided_slice %198 {offsets = [0, 96], sizes = [8, 32], strides = [1, 1]} : vector<8x128xf32> to vector<8x32xf32>
    %206 = math.tanh %205 : vector<8x32xf32>
    %207 = vector.extract_strided_slice %204 {offsets = [0, 0], sizes = [8, 32], strides = [1, 1]} : vector<8x96xf32> to vector<8x32xf32>
    %208 = vector.extract_strided_slice %204 {offsets = [0, 32], sizes = [8, 32], strides = [1, 1]} : vector<8x96xf32> to vector<8x32xf32>
    %209 = vector.extract_strided_slice %204 {offsets = [0, 64], sizes = [8, 32], strides = [1, 1]} : vector<8x96xf32> to vector<8x32xf32>
    %210 = arith.mulf %208, %186 : vector<8x32xf32>
    %211 = arith.mulf %207, %206 : vector<8x32xf32>
    %212 = arith.addf %210, %211 : vector<8x32xf32>
    %213 = math.tanh %212 : vector<8x32xf32>
    %214 = arith.mulf %209, %213 : vector<8x32xf32>
    %215 = arith.index_cast %192 : i32 to index
    %c0_63 = arith.constant 0 : index
    %216 = vector.load %arg11[%215, %c0_63] : memref<64x32xf32, #tpu.memory_space<vmem>>, vector<8x32xf32>
    tpu.vector_store %arg11[%215, %c0_63], %214 {strides = array<i32>} : memref<64x32xf32, #tpu.memory_space<vmem>>, vector<8x32xf32>,
    %c8_i32_64 = arith.constant 8 : i32
    %c0_65 = arith.constant 0 : index
    %c0_66 = arith.constant 0 : index
    %217 = vector.load %arg11[%c0_65, %c0_66] : memref<64x32xf32, #tpu.memory_space<vmem>>, vector<64x32xf32>
    %218 = arith.truncf %217 : vector<64x32xf32> to vector<64x32xbf16>
    %c0_67 = arith.constant 0 : index
    %c0_68 = arith.constant 0 : index
    %c0_69 = arith.constant 0 : index
    %219 = vector.load %arg4[%c0_67, %c0_68, %c0_69] : memref<1x32x128xbf16, #tpu.memory_space<vmem>>, vector<1x32x128xbf16>
    %220 = vector.shape_cast %219 : vector<1x32x128xbf16> to vector<32x128xbf16>
    %cst_70 = arith.constant dense<0.000000e+00> : vector<64x128xf32>
    %221 = tpu.matmul %218, %220, %cst_70 {dimension_numbers = #tpu.dot_dimension_numbers<[1], [0], [0], [1], [0, 0, 1, 1], [], []>} : vector<64x32xbf16>, vector<32x128xbf16>, vector<64x128xf32> -> vector<64x128xf32>
    %c0_71 = arith.constant 0 : index
    %c0_72 = arith.constant 0 : index
    %c0_73 = arith.constant 0 : index
    %222 = vector.load %arg6[%c0_71, %c0_72, %c0_73] : memref<1x1x128xf32, #tpu.memory_space<vmem>>, vector<1x1x128xf32>
    %223 = vector.shape_cast %222 : vector<1x1x128xf32> to vector<1x128xf32>
    %224 = vector.broadcast %223 : vector<1x128xf32> to vector<64x128xf32>
    %225 = arith.addf %221, %224 : vector<64x128xf32>
    %c0_74 = arith.constant 0 : index
    %c0_75 = arith.constant 0 : index
    %226 = vector.load %arg10[%c0_74, %c0_75] : memref<64x128xf32, #tpu.memory_space<vmem>>, vector<64x128xf32>
    tpu.vector_store %arg10[%c0_74, %c0_75], %225 {strides = array<i32>} : memref<64x128xf32, #tpu.memory_space<vmem>>, vector<64x128xf32>,
    %cst_76 = arith.constant 0.000000e+00 : f32
    %227 = vector.broadcast %cst_76 : f32 to vector<8x32xf32>
    %cst_77 = arith.constant 0.000000e+00 : f32
    %228 = vector.broadcast %cst_77 : f32 to vector<8x32xf32>
    %c0_i32_78 = arith.constant 0 : i32
    %c8_i32_79 = arith.constant 8 : i32
    %229 = arith.muli %c0_i32_78, %c8_i32_79 : i32
    %230 = tpu.assume_multiple %229, 8 : i32
    %231 = arith.index_cast %230 : i32 to index
    %c0_80 = arith.constant 0 : index
    %232 = vector.load %arg10[%231, %c0_80] : memref<64x128xf32, #tpu.memory_space<vmem>>, vector<8x128xf32>
    %233 = arith.truncf %227 : vector<8x32xf32> to vector<8x32xbf16>
    %c0_81 = arith.constant 0 : index
    %c0_82 = arith.constant 0 : index
    %c0_83 = arith.constant 0 : index
    %234 = vector.load %arg5[%c0_81, %c0_82, %c0_83] : memref<1x32x128xbf16, #tpu.memory_space<vmem>>, vector<1x32x128xbf16>
    %235 = vector.shape_cast %234 : vector<1x32x128xbf16> to vector<32x128xbf16>
    %cst_84 = arith.constant dense<0.000000e+00> : vector<8x128xf32>
    %236 = tpu.matmul %233, %235, %cst_84 {dimension_numbers = #tpu.dot_dimension_numbers<[1], [0], [0], [1], [0, 0, 1, 1], [], []>} : vector<8x32xbf16>, vector<32x128xbf16>, vector<8x128xf32> -> vector<8x128xf32>
    %237 = arith.addf %232, %236 : vector<8x128xf32>
    %238 = vector.extract_strided_slice %237 {offsets = [0, 0], sizes = [8, 96], strides = [1, 1]} : vector<8x128xf32> to vector<8x96xf32>
    %239 = arith.negf %238 : vector<8x96xf32>
    %240 = math.exp %239 : vector<8x96xf32>
    %cst_85 = arith.constant 1.000000e+00 : f32
    %241 = vector.broadcast %cst_85 : f32 to vector<8x96xf32>
    %242 = arith.addf %241, %240 : vector<8x96xf32>
    %243 = arith.divf %241, %242 : vector<8x96xf32>
    %244 = vector.extract_strided_slice %237 {offsets = [0, 96], sizes = [8, 32], strides = [1, 1]} : vector<8x128xf32> to vector<8x32xf32>
    %245 = math.tanh %244 : vector<8x32xf32>
    %246 = vector.extract_strided_slice %243 {offsets = [0, 0], sizes = [8, 32], strides = [1, 1]} : vector<8x96xf32> to vector<8x32xf32>
    %247 = vector.extract_strided_slice %243 {offsets = [0, 32], sizes = [8, 32], strides = [1, 1]} : vector<8x96xf32> to vector<8x32xf32>
    %248 = vector.extract_strided_slice %243 {offsets = [0, 64], sizes = [8, 32], strides = [1, 1]} : vector<8x96xf32> to vector<8x32xf32>
    %249 = arith.mulf %247, %228 : vector<8x32xf32>
    %250 = arith.mulf %246, %245 : vector<8x32xf32>
    %251 = arith.addf %249, %250 : vector<8x32xf32>
    %252 = math.tanh %251 : vector<8x32xf32>
    %253 = arith.mulf %248, %252 : vector<8x32xf32>
    %c1_i32_86 = arith.constant 1 : i32
    %c8_i32_87 = arith.constant 8 : i32
    %254 = arith.muli %c1_i32_86, %c8_i32_87 : i32
    %255 = tpu.assume_multiple %254, 8 : i32
    %256 = arith.index_cast %255 : i32 to index
    %c0_88 = arith.constant 0 : index
    %257 = vector.load %arg10[%256, %c0_88] : memref<64x128xf32, #tpu.memory_space<vmem>>, vector<8x128xf32>
    %258 = arith.truncf %253 : vector<8x32xf32> to vector<8x32xbf16>
    %c0_89 = arith.constant 0 : index
    %c0_90 = arith.constant 0 : index
    %c0_91 = arith.constant 0 : index
    %259 = vector.load %arg5[%c0_89, %c0_90, %c0_91] : memref<1x32x128xbf16, #tpu.memory_space<vmem>>, vector<1x32x128xbf16>
    %260 = vector.shape_cast %259 : vector<1x32x128xbf16> to vector<32x128xbf16>
    %cst_92 = arith.constant dense<0.000000e+00> : vector<8x128xf32>
    %261 = tpu.matmul %258, %260, %cst_92 {dimension_numbers = #tpu.dot_dimension_numbers<[1], [0], [0], [1], [0, 0, 1, 1], [], []>} : vector<8x32xbf16>, vector<32x128xbf16>, vector<8x128xf32> -> vector<8x128xf32>
    %262 = arith.addf %257, %261 : vector<8x128xf32>
    %263 = vector.extract_strided_slice %262 {offsets = [0, 0], sizes = [8, 96], strides = [1, 1]} : vector<8x128xf32> to vector<8x96xf32>
    %264 = arith.negf %263 : vector<8x96xf32>
    %265 = math.exp %264 : vector<8x96xf32>
    %cst_93 = arith.constant 1.000000e+00 : f32
    %266 = vector.broadcast %cst_93 : f32 to vector<8x96xf32>
    %267 = arith.addf %266, %265 : vector<8x96xf32>
    %268 = arith.divf %266, %267 : vector<8x96xf32>
    %269 = vector.extract_strided_slice %262 {offsets = [0, 96], sizes = [8, 32], strides = [1, 1]} : vector<8x128xf32> to vector<8x32xf32>
    %270 = math.tanh %269 : vector<8x32xf32>
    %271 = vector.extract_strided_slice %268 {offsets = [0, 0], sizes = [8, 32], strides = [1, 1]} : vector<8x96xf32> to vector<8x32xf32>
    %272 = vector.extract_strided_slice %268 {offsets = [0, 32], sizes = [8, 32], strides = [1, 1]} : vector<8x96xf32> to vector<8x32xf32>
    %273 = vector.extract_strided_slice %268 {offsets = [0, 64], sizes = [8, 32], strides = [1, 1]} : vector<8x96xf32> to vector<8x32xf32>
    %274 = arith.mulf %272, %251 : vector<8x32xf32>
    %275 = arith.mulf %271, %270 : vector<8x32xf32>
    %276 = arith.addf %274, %275 : vector<8x32xf32>
    %277 = math.tanh %276 : vector<8x32xf32>
    %278 = arith.mulf %273, %277 : vector<8x32xf32>
    %c2_i32_94 = arith.constant 2 : i32
    %c8_i32_95 = arith.constant 8 : i32
    %279 = arith.muli %c2_i32_94, %c8_i32_95 : i32
    %280 = tpu.assume_multiple %279, 8 : i32
    %281 = arith.index_cast %280 : i32 to index
    %c0_96 = arith.constant 0 : index
    %282 = vector.load %arg10[%281, %c0_96] : memref<64x128xf32, #tpu.memory_space<vmem>>, vector<8x128xf32>
    %283 = arith.truncf %278 : vector<8x32xf32> to vector<8x32xbf16>
    %c0_97 = arith.constant 0 : index
    %c0_98 = arith.constant 0 : index
    %c0_99 = arith.constant 0 : index
    %284 = vector.load %arg5[%c0_97, %c0_98, %c0_99] : memref<1x32x128xbf16, #tpu.memory_space<vmem>>, vector<1x32x128xbf16>
    %285 = vector.shape_cast %284 : vector<1x32x128xbf16> to vector<32x128xbf16>
    %cst_100 = arith.constant dense<0.000000e+00> : vector<8x128xf32>
    %286 = tpu.matmul %283, %285, %cst_100 {dimension_numbers = #tpu.dot_dimension_numbers<[1], [0], [0], [1], [0, 0, 1, 1], [], []>} : vector<8x32xbf16>, vector<32x128xbf16>, vector<8x128xf32> -> vector<8x128xf32>
    %287 = arith.addf %282, %286 : vector<8x128xf32>
    %288 = vector.extract_strided_slice %287 {offsets = [0, 0], sizes = [8, 96], strides = [1, 1]} : vector<8x128xf32> to vector<8x96xf32>
    %289 = arith.negf %288 : vector<8x96xf32>
    %290 = math.exp %289 : vector<8x96xf32>
    %cst_101 = arith.constant 1.000000e+00 : f32
    %291 = vector.broadcast %cst_101 : f32 to vector<8x96xf32>
    %292 = arith.addf %291, %290 : vector<8x96xf32>
    %293 = arith.divf %291, %292 : vector<8x96xf32>
    %294 = vector.extract_strided_slice %287 {offsets = [0, 96], sizes = [8, 32], strides = [1, 1]} : vector<8x128xf32> to vector<8x32xf32>
    %295 = math.tanh %294 : vector<8x32xf32>
    %296 = vector.extract_strided_slice %293 {offsets = [0, 0], sizes = [8, 32], strides = [1, 1]} : vector<8x96xf32> to vector<8x32xf32>
    %297 = vector.extract_strided_slice %293 {offsets = [0, 32], sizes = [8, 32], strides = [1, 1]} : vector<8x96xf32> to vector<8x32xf32>
    %298 = vector.extract_strided_slice %293 {offsets = [0, 64], sizes = [8, 32], strides = [1, 1]} : vector<8x96xf32> to vector<8x32xf32>
    %299 = arith.mulf %297, %276 : vector<8x32xf32>
    %300 = arith.mulf %296, %295 : vector<8x32xf32>
    %301 = arith.addf %299, %300 : vector<8x32xf32>
    %302 = math.tanh %301 : vector<8x32xf32>
    %303 = arith.mulf %298, %302 : vector<8x32xf32>
    %c3_i32_102 = arith.constant 3 : i32
    %c8_i32_103 = arith.constant 8 : i32
    %304 = arith.muli %c3_i32_102, %c8_i32_103 : i32
    %305 = tpu.assume_multiple %304, 8 : i32
    %306 = arith.index_cast %305 : i32 to index
    %c0_104 = arith.constant 0 : index
    %307 = vector.load %arg10[%306, %c0_104] : memref<64x128xf32, #tpu.memory_space<vmem>>, vector<8x128xf32>
    %308 = arith.truncf %303 : vector<8x32xf32> to vector<8x32xbf16>
    %c0_105 = arith.constant 0 : index
    %c0_106 = arith.constant 0 : index
    %c0_107 = arith.constant 0 : index
    %309 = vector.load %arg5[%c0_105, %c0_106, %c0_107] : memref<1x32x128xbf16, #tpu.memory_space<vmem>>, vector<1x32x128xbf16>
    %310 = vector.shape_cast %309 : vector<1x32x128xbf16> to vector<32x128xbf16>
    %cst_108 = arith.constant dense<0.000000e+00> : vector<8x128xf32>
    %311 = tpu.matmul %308, %310, %cst_108 {dimension_numbers = #tpu.dot_dimension_numbers<[1], [0], [0], [1], [0, 0, 1, 1], [], []>} : vector<8x32xbf16>, vector<32x128xbf16>, vector<8x128xf32> -> vector<8x128xf32>
    %312 = arith.addf %307, %311 : vector<8x128xf32>
    %313 = vector.extract_strided_slice %312 {offsets = [0, 0], sizes = [8, 96], strides = [1, 1]} : vector<8x128xf32> to vector<8x96xf32>
    %314 = arith.negf %313 : vector<8x96xf32>
    %315 = math.exp %314 : vector<8x96xf32>
    %cst_109 = arith.constant 1.000000e+00 : f32
    %316 = vector.broadcast %cst_109 : f32 to vector<8x96xf32>
    %317 = arith.addf %316, %315 : vector<8x96xf32>
    %318 = arith.divf %316, %317 : vector<8x96xf32>
    %319 = vector.extract_strided_slice %312 {offsets = [0, 96], sizes = [8, 32], strides = [1, 1]} : vector<8x128xf32> to vector<8x32xf32>
    %320 = math.tanh %319 : vector<8x32xf32>
    %321 = vector.extract_strided_slice %318 {offsets = [0, 0], sizes = [8, 32], strides = [1, 1]} : vector<8x96xf32> to vector<8x32xf32>
    %322 = vector.extract_strided_slice %318 {offsets = [0, 32], sizes = [8, 32], strides = [1, 1]} : vector<8x96xf32> to vector<8x32xf32>
    %323 = vector.extract_strided_slice %318 {offsets = [0, 64], sizes = [8, 32], strides = [1, 1]} : vector<8x96xf32> to vector<8x32xf32>
    %324 = arith.mulf %322, %301 : vector<8x32xf32>
    %325 = arith.mulf %321, %320 : vector<8x32xf32>
    %326 = arith.addf %324, %325 : vector<8x32xf32>
    %327 = math.tanh %326 : vector<8x32xf32>
    %328 = arith.mulf %323, %327 : vector<8x32xf32>
    %c4_i32_110 = arith.constant 4 : i32
    %c8_i32_111 = arith.constant 8 : i32
    %329 = arith.muli %c4_i32_110, %c8_i32_111 : i32
    %330 = tpu.assume_multiple %329, 8 : i32
    %331 = arith.index_cast %330 : i32 to index
    %c0_112 = arith.constant 0 : index
    %332 = vector.load %arg10[%331, %c0_112] : memref<64x128xf32, #tpu.memory_space<vmem>>, vector<8x128xf32>
    %333 = arith.truncf %328 : vector<8x32xf32> to vector<8x32xbf16>
    %c0_113 = arith.constant 0 : index
    %c0_114 = arith.constant 0 : index
    %c0_115 = arith.constant 0 : index
    %334 = vector.load %arg5[%c0_113, %c0_114, %c0_115] : memref<1x32x128xbf16, #tpu.memory_space<vmem>>, vector<1x32x128xbf16>
    %335 = vector.shape_cast %334 : vector<1x32x128xbf16> to vector<32x128xbf16>
    %cst_116 = arith.constant dense<0.000000e+00> : vector<8x128xf32>
    %336 = tpu.matmul %333, %335, %cst_116 {dimension_numbers = #tpu.dot_dimension_numbers<[1], [0], [0], [1], [0, 0, 1, 1], [], []>} : vector<8x32xbf16>, vector<32x128xbf16>, vector<8x128xf32> -> vector<8x128xf32>
    %337 = arith.addf %332, %336 : vector<8x128xf32>
    %338 = vector.extract_strided_slice %337 {offsets = [0, 0], sizes = [8, 96], strides = [1, 1]} : vector<8x128xf32> to vector<8x96xf32>
    %339 = arith.negf %338 : vector<8x96xf32>
    %340 = math.exp %339 : vector<8x96xf32>
    %cst_117 = arith.constant 1.000000e+00 : f32
    %341 = vector.broadcast %cst_117 : f32 to vector<8x96xf32>
    %342 = arith.addf %341, %340 : vector<8x96xf32>
    %343 = arith.divf %341, %342 : vector<8x96xf32>
    %344 = vector.extract_strided_slice %337 {offsets = [0, 96], sizes = [8, 32], strides = [1, 1]} : vector<8x128xf32> to vector<8x32xf32>
    %345 = math.tanh %344 : vector<8x32xf32>
    %346 = vector.extract_strided_slice %343 {offsets = [0, 0], sizes = [8, 32], strides = [1, 1]} : vector<8x96xf32> to vector<8x32xf32>
    %347 = vector.extract_strided_slice %343 {offsets = [0, 32], sizes = [8, 32], strides = [1, 1]} : vector<8x96xf32> to vector<8x32xf32>
    %348 = vector.extract_strided_slice %343 {offsets = [0, 64], sizes = [8, 32], strides = [1, 1]} : vector<8x96xf32> to vector<8x32xf32>
    %349 = arith.mulf %347, %326 : vector<8x32xf32>
    %350 = arith.mulf %346, %345 : vector<8x32xf32>
    %351 = arith.addf %349, %350 : vector<8x32xf32>
    %352 = math.tanh %351 : vector<8x32xf32>
    %353 = arith.mulf %348, %352 : vector<8x32xf32>
    %c5_i32_118 = arith.constant 5 : i32
    %c8_i32_119 = arith.constant 8 : i32
    %354 = arith.muli %c5_i32_118, %c8_i32_119 : i32
    %355 = tpu.assume_multiple %354, 8 : i32
    %356 = arith.index_cast %355 : i32 to index
    %c0_120 = arith.constant 0 : index
    %357 = vector.load %arg10[%356, %c0_120] : memref<64x128xf32, #tpu.memory_space<vmem>>, vector<8x128xf32>
    %358 = arith.truncf %353 : vector<8x32xf32> to vector<8x32xbf16>
    %c0_121 = arith.constant 0 : index
    %c0_122 = arith.constant 0 : index
    %c0_123 = arith.constant 0 : index
    %359 = vector.load %arg5[%c0_121, %c0_122, %c0_123] : memref<1x32x128xbf16, #tpu.memory_space<vmem>>, vector<1x32x128xbf16>
    %360 = vector.shape_cast %359 : vector<1x32x128xbf16> to vector<32x128xbf16>
    %cst_124 = arith.constant dense<0.000000e+00> : vector<8x128xf32>
    %361 = tpu.matmul %358, %360, %cst_124 {dimension_numbers = #tpu.dot_dimension_numbers<[1], [0], [0], [1], [0, 0, 1, 1], [], []>} : vector<8x32xbf16>, vector<32x128xbf16>, vector<8x128xf32> -> vector<8x128xf32>
    %362 = arith.addf %357, %361 : vector<8x128xf32>
    %363 = vector.extract_strided_slice %362 {offsets = [0, 0], sizes = [8, 96], strides = [1, 1]} : vector<8x128xf32> to vector<8x96xf32>
    %364 = arith.negf %363 : vector<8x96xf32>
    %365 = math.exp %364 : vector<8x96xf32>
    %cst_125 = arith.constant 1.000000e+00 : f32
    %366 = vector.broadcast %cst_125 : f32 to vector<8x96xf32>
    %367 = arith.addf %366, %365 : vector<8x96xf32>
    %368 = arith.divf %366, %367 : vector<8x96xf32>
    %369 = vector.extract_strided_slice %362 {offsets = [0, 96], sizes = [8, 32], strides = [1, 1]} : vector<8x128xf32> to vector<8x32xf32>
    %370 = math.tanh %369 : vector<8x32xf32>
    %371 = vector.extract_strided_slice %368 {offsets = [0, 0], sizes = [8, 32], strides = [1, 1]} : vector<8x96xf32> to vector<8x32xf32>
    %372 = vector.extract_strided_slice %368 {offsets = [0, 32], sizes = [8, 32], strides = [1, 1]} : vector<8x96xf32> to vector<8x32xf32>
    %373 = vector.extract_strided_slice %368 {offsets = [0, 64], sizes = [8, 32], strides = [1, 1]} : vector<8x96xf32> to vector<8x32xf32>
    %374 = arith.mulf %372, %351 : vector<8x32xf32>
    %375 = arith.mulf %371, %370 : vector<8x32xf32>
    %376 = arith.addf %374, %375 : vector<8x32xf32>
    %377 = math.tanh %376 : vector<8x32xf32>
    %378 = arith.mulf %373, %377 : vector<8x32xf32>
    %c6_i32_126 = arith.constant 6 : i32
    %c8_i32_127 = arith.constant 8 : i32
    %379 = arith.muli %c6_i32_126, %c8_i32_127 : i32
    %380 = tpu.assume_multiple %379, 8 : i32
    %381 = arith.index_cast %380 : i32 to index
    %c0_128 = arith.constant 0 : index
    %382 = vector.load %arg10[%381, %c0_128] : memref<64x128xf32, #tpu.memory_space<vmem>>, vector<8x128xf32>
    %383 = arith.truncf %378 : vector<8x32xf32> to vector<8x32xbf16>
    %c0_129 = arith.constant 0 : index
    %c0_130 = arith.constant 0 : index
    %c0_131 = arith.constant 0 : index
    %384 = vector.load %arg5[%c0_129, %c0_130, %c0_131] : memref<1x32x128xbf16, #tpu.memory_space<vmem>>, vector<1x32x128xbf16>
    %385 = vector.shape_cast %384 : vector<1x32x128xbf16> to vector<32x128xbf16>
    %cst_132 = arith.constant dense<0.000000e+00> : vector<8x128xf32>
    %386 = tpu.matmul %383, %385, %cst_132 {dimension_numbers = #tpu.dot_dimension_numbers<[1], [0], [0], [1], [0, 0, 1, 1], [], []>} : vector<8x32xbf16>, vector<32x128xbf16>, vector<8x128xf32> -> vector<8x128xf32>
    %387 = arith.addf %382, %386 : vector<8x128xf32>
    %388 = vector.extract_strided_slice %387 {offsets = [0, 0], sizes = [8, 96], strides = [1, 1]} : vector<8x128xf32> to vector<8x96xf32>
    %389 = arith.negf %388 : vector<8x96xf32>
    %390 = math.exp %389 : vector<8x96xf32>
    %cst_133 = arith.constant 1.000000e+00 : f32
    %391 = vector.broadcast %cst_133 : f32 to vector<8x96xf32>
    %392 = arith.addf %391, %390 : vector<8x96xf32>
    %393 = arith.divf %391, %392 : vector<8x96xf32>
    %394 = vector.extract_strided_slice %387 {offsets = [0, 96], sizes = [8, 32], strides = [1, 1]} : vector<8x128xf32> to vector<8x32xf32>
    %395 = math.tanh %394 : vector<8x32xf32>
    %396 = vector.extract_strided_slice %393 {offsets = [0, 0], sizes = [8, 32], strides = [1, 1]} : vector<8x96xf32> to vector<8x32xf32>
    %397 = vector.extract_strided_slice %393 {offsets = [0, 32], sizes = [8, 32], strides = [1, 1]} : vector<8x96xf32> to vector<8x32xf32>
    %398 = vector.extract_strided_slice %393 {offsets = [0, 64], sizes = [8, 32], strides = [1, 1]} : vector<8x96xf32> to vector<8x32xf32>
    %399 = arith.mulf %397, %376 : vector<8x32xf32>
    %400 = arith.mulf %396, %395 : vector<8x32xf32>
    %401 = arith.addf %399, %400 : vector<8x32xf32>
    %402 = math.tanh %401 : vector<8x32xf32>
    %403 = arith.mulf %398, %402 : vector<8x32xf32>
    %c7_i32_134 = arith.constant 7 : i32
    %c8_i32_135 = arith.constant 8 : i32
    %404 = arith.muli %c7_i32_134, %c8_i32_135 : i32
    %405 = tpu.assume_multiple %404, 8 : i32
    %406 = arith.index_cast %405 : i32 to index
    %c0_136 = arith.constant 0 : index
    %407 = vector.load %arg10[%406, %c0_136] : memref<64x128xf32, #tpu.memory_space<vmem>>, vector<8x128xf32>
    %408 = arith.truncf %403 : vector<8x32xf32> to vector<8x32xbf16>
    %c0_137 = arith.constant 0 : index
    %c0_138 = arith.constant 0 : index
    %c0_139 = arith.constant 0 : index
    %409 = vector.load %arg5[%c0_137, %c0_138, %c0_139] : memref<1x32x128xbf16, #tpu.memory_space<vmem>>, vector<1x32x128xbf16>
    %410 = vector.shape_cast %409 : vector<1x32x128xbf16> to vector<32x128xbf16>
    %cst_140 = arith.constant dense<0.000000e+00> : vector<8x128xf32>
    %411 = tpu.matmul %408, %410, %cst_140 {dimension_numbers = #tpu.dot_dimension_numbers<[1], [0], [0], [1], [0, 0, 1, 1], [], []>} : vector<8x32xbf16>, vector<32x128xbf16>, vector<8x128xf32> -> vector<8x128xf32>
    %412 = arith.addf %407, %411 : vector<8x128xf32>
    %413 = vector.extract_strided_slice %412 {offsets = [0, 0], sizes = [8, 96], strides = [1, 1]} : vector<8x128xf32> to vector<8x96xf32>
    %414 = arith.negf %413 : vector<8x96xf32>
    %415 = math.exp %414 : vector<8x96xf32>
    %cst_141 = arith.constant 1.000000e+00 : f32
    %416 = vector.broadcast %cst_141 : f32 to vector<8x96xf32>
    %417 = arith.addf %416, %415 : vector<8x96xf32>
    %418 = arith.divf %416, %417 : vector<8x96xf32>
    %419 = vector.extract_strided_slice %412 {offsets = [0, 96], sizes = [8, 32], strides = [1, 1]} : vector<8x128xf32> to vector<8x32xf32>
    %420 = math.tanh %419 : vector<8x32xf32>
    %421 = vector.extract_strided_slice %418 {offsets = [0, 0], sizes = [8, 32], strides = [1, 1]} : vector<8x96xf32> to vector<8x32xf32>
    %422 = vector.extract_strided_slice %418 {offsets = [0, 32], sizes = [8, 32], strides = [1, 1]} : vector<8x96xf32> to vector<8x32xf32>
    %423 = vector.extract_strided_slice %418 {offsets = [0, 64], sizes = [8, 32], strides = [1, 1]} : vector<8x96xf32> to vector<8x32xf32>
    %424 = arith.mulf %422, %401 : vector<8x32xf32>
    %425 = arith.mulf %421, %420 : vector<8x32xf32>
    %426 = arith.addf %424, %425 : vector<8x32xf32>
    %427 = math.tanh %426 : vector<8x32xf32>
    %428 = arith.mulf %423, %427 : vector<8x32xf32>
    %c8_i32_142 = arith.constant 8 : i32
    %429 = arith.truncf %428 : vector<8x32xf32> to vector<8x32xbf16>
    %c0_143 = arith.constant 0 : index
    %c0_144 = arith.constant 0 : index
    %430 = vector.load %arg7[%c0_143, %c0_144] : memref<32x4xbf16, #tpu.memory_space<vmem>>, vector<32x4xbf16>
    %cst_145 = arith.constant dense<0.000000e+00> : vector<8x4xf32>
    %431 = tpu.matmul %429, %430, %cst_145 {dimension_numbers = #tpu.dot_dimension_numbers<[1], [0], [0], [1], [0, 0, 1, 1], [], []>} : vector<8x32xbf16>, vector<32x4xbf16>, vector<8x4xf32> -> vector<8x4xf32>
    %c0_146 = arith.constant 0 : index
    %c0_147 = arith.constant 0 : index
    %432 = vector.load %arg8[%c0_146, %c0_147] : memref<1x4xf32, #tpu.memory_space<vmem>>, vector<1x4xf32>
    %433 = vector.broadcast %432 : vector<1x4xf32> to vector<8x4xf32>
    %434 = arith.addf %431, %433 : vector<8x4xf32>
    %c0_148 = arith.constant 0 : index
    %c0_149 = arith.constant 0 : index
    %435 = vector.load %arg9[%c0_148, %c0_149] : memref<8x4xf32, #tpu.memory_space<vmem>>, vector<8x4xf32>
    tpu.vector_store %arg9[%c0_148, %c0_149], %434 {strides = array<i32>} : memref<8x4xf32, #tpu.memory_space<vmem>>, vector<8x4xf32>,
    return
  }
}

</mosaic_0001>

<llo_original>
// kernel: a_call__.1
$region0: #{a_call__.1}
  #allocation0 [shape = 'u32[]', space=smem, size = 0x4, offset = 0x4, fixed_abs, tag = 'smem constant byte address 0x4 - core index']
  #allocation1 [shape = 'u32[72,128]{1,0:T(1,128)}', space=vmem, size = 0x9000, scoped, tag = 'internal scratch']
  #allocation2 [shape = 'f32[64,128]{1,0:T(8,128)}', space=vmem, size = 0x8000, scoped, tag = 'scratch operand']
  #allocation3 [shape = 'f32[64,32]{1,0:T(8,128)}', space=vmem, size = 0x8000, scoped, tag = 'scratch operand']
  %s0 = inlined_call_operand.vmem [shape: bf16[64,16], index: 0, kind: input, shape index: {}]
  %s1 = inlined_call_operand.vmem [shape: bf16[16,128], index: 1, kind: input, shape index: {}]
  %s2 = inlined_call_operand.vmem [shape: bf16[32,128], index: 2, kind: input, shape index: {}]
  %s3 = inlined_call_operand.vmem [shape: f32[1,128], index: 3, kind: input, shape index: {}]
  %s4 = inlined_call_operand.vmem [shape: bf16[1,32,128], index: 4, kind: input, shape index: {}]
  %s5 = inlined_call_operand.vmem [shape: bf16[1,32,128], index: 5, kind: input, shape index: {}]
  %s6 = inlined_call_operand.vmem [shape: f32[1,1,128], index: 6, kind: input, shape index: {}]
  %s7 = inlined_call_operand.vmem [shape: bf16[32,4], index: 7, kind: input, shape index: {}]
  %s8 = inlined_call_operand.vmem [shape: f32[1,4], index: 8, kind: input, shape index: {}]
  %s9 = inlined_call_operand.vmem [shape: f32[8,4], index: 9, kind: output, shape index: {}]
  %s10 = sld [smem:[#allocation0]]
  $region46: #{a_call__.1} parent=0
    _
  %s12 = ssub.s32 1, %s10
  %s13 = scalar_select 0, %s12, %s10
  // Predicated region
  $region2: #{a_call__.1} parent=0 // pred_check
    _
  $region3: #{a_call__.1} parent=0 // pred_check_branch
    %15 = sbr.rel (0) target = $region5
  $region4: #{a_call__.1} parent=0 // pred_region
    _
  $region5: #{a_call__.1} parent=0 // pred_fallthru
    _
  // Predicated region
  $region6: #{a_call__.1} parent=0 // pred_check
    _
  $region7: #{a_call__.1} parent=0 // pred_check_branch
    %17 = sbr.rel (0) target = $region9
  $region8: #{a_call__.1} parent=0 // pred_region
    _
  $region9: #{a_call__.1} parent=0 // pred_fallthru
    _
  // Predicated region
  $region10: #{a_call__.1} parent=0 // pred_check
    _
  $region11: #{a_call__.1} parent=0 // pred_check_branch
    %19 = sbr.rel (0) target = $region13
  $region12: #{a_call__.1} parent=0 // pred_region
    _
  $region13: #{a_call__.1} parent=0 // pred_fallthru
    _
  // Predicated region
  $region14: #{a_call__.1} parent=0 // pred_check
    _
  $region15: #{a_call__.1} parent=0 // pred_check_branch
    %21 = sbr.rel (0) target = $region17
  $region16: #{a_call__.1} parent=0 // pred_region
    _
  $region17: #{a_call__.1} parent=0 // pred_fallthru
    _
  // Predicated region
  $region18: #{a_call__.1} parent=0 // pred_check
    _
  $region19: #{a_call__.1} parent=0 // pred_check_branch
    %23 = sbr.rel (0) target = $region21
  $region20: #{a_call__.1} parent=0 // pred_region
    _
  $region21: #{a_call__.1} parent=0 // pred_fallthru
    _
  // Predicated region
  $region22: #{a_call__.1} parent=0 // pred_check
    _
  $region23: #{a_call__.1} parent=0 // pred_check_branch
    %25 = sbr.rel (0) target = $region25
  $region24: #{a_call__.1} parent=0 // pred_region
    _
  $region25: #{a_call__.1} parent=0 // pred_fallthru
    _
  // Predicated region
  $region26: #{a_call__.1} parent=0 // pred_check
    _
  $region27: #{a_call__.1} parent=0 // pred_check_branch
    %27 = sbr.rel (0) target = $region29
  $region28: #{a_call__.1} parent=0 // pred_region
    _
  $region29: #{a_call__.1} parent=0 // pred_fallthru
    _
  // Predicated region
  $region30: #{a_call__.1} parent=0 // pred_check
    _
  $region31: #{a_call__.1} parent=0 // pred_check_branch
    %29 = sbr.rel (0) target = $region33
  $region32: #{a_call__.1} parent=0 // pred_region
    _
  $region33: #{a_call__.1} parent=0 // pred_fallthru
    _
  // Predicated region
  $region34: #{a_call__.1} parent=0 // pred_check
    _
  $region35: #{a_call__.1} parent=0 // pred_check_branch
    %31 = sbr.rel (0) target = $region37
  $region36: #{a_call__.1} parent=0 // pred_region
    _
  $region37: #{a_call__.1} parent=0 // pred_fallthru
    _
  %v33 = vld [vmem:[%s0] sm:$0xf]
  %v34 = vld [vmem:[%s0 + $0x4] sm:$0xf]
  %v35 = vld [vmem:[%s0 + $0x8] sm:$0xf]
  %v36 = vld [vmem:[%s0 + $0xc] sm:$0xf]
  %v37 = vld [vmem:[%s0 + $0x10] sm:$0xf]
  %v38 = vld [vmem:[%s0 + $0x14] sm:$0xf]
  %v39 = vld [vmem:[%s0 + $0x18] sm:$0xf]
  %v40 = vld [vmem:[%s0 + $0x1c] sm:$0xf]
  %v41 = vld [vmem:[%s1] sm:$0xf]
  %v42 = vld [vmem:[%s1 + $0x4] sm:$0xf]
  %v43 = vld [vmem:[%s3] sm:$0x1]
  %v45 = vperm.slane %v43, 0
  %v55 = vunpack.c.l.b16 %v33
  %v56 = vunpack.c.l.b16 %v34
  %v57 = vunpack.c.l.b16 %v35
  %v58 = vunpack.c.l.b16 %v36
  %v59 = vunpack.c.l.b16 %v37
  %v60 = vunpack.c.l.b16 %v38
  %v61 = vunpack.c.l.b16 %v39
  %v62 = vunpack.c.l.b16 %v40
  %v63 = vpack.c.b16 %v56, %v55
  %v64 = vpack.c.b16 %v58, %v57
  %v65 = vpack.c.b16 %v60, %v59
  %v66 = vpack.c.b16 %v62, %v61
  %v69 = vunpack.c.l.b16 %v41
  %v70 = vunpack.c.l.b16 %v42
  %v71 = vpack.c.b16 %v70, %v69
  %vm73 = vcmask 130048
  %v75 = vsel %vm73, %v63, 0
  %v78 = vsel %vm73, %v64, 0
  %v81 = vsel %vm73, %v65, 0
  %v84 = vsel %vm73, %v66, 0
  %86 = vmatpush.bf16.msra.mxu0 0
  %87 = vmatpush.bf16.msra.mxu0 0
  %88 = vmatpush.bf16.msra.mxu0 0
  %89 = vmatpush.bf16.msra.mxu0 0
  %90 = vmatpush.bf16.msra.mxu0 0
  %91 = vmatpush.bf16.msra.mxu0 0
  %92 = vmatpush.bf16.msra.mxu0 0
  %93 = vmatpush.bf16.msra.mxu0 %v71
  %94 = vmatmul.bf16.gmra.mxu0 %v75
  %v95 = vpop.f32.mrf.mxu0
  %v96 = vadd.f32 %v45, %v95
  %v97 = vpop.f32.mrf.mxu0
  %v98 = vadd.f32 %v45, %v97
  %99 = vmatmul.bf16.gmra.mxu0 %v78
  %v100 = vpop.f32.mrf.mxu0
  %v101 = vadd.f32 %v45, %v100
  %v102 = vpop.f32.mrf.mxu0
  %v103 = vadd.f32 %v45, %v102
  %104 = vmatmul.bf16.gmra.mxu0 %v81
  %v105 = vpop.f32.mrf.mxu0
  %v106 = vadd.f32 %v45, %v105
  %v107 = vpop.f32.mrf.mxu0
  %v108 = vadd.f32 %v45, %v107
  %109 = vmatmul.bf16.gmra.mxu0 %v84
  %v110 = vpop.f32.mrf.mxu0
  %v111 = vadd.f32 %v45, %v110
  %v112 = vpop.f32.mrf.mxu0
  %v113 = vadd.f32 %v45, %v112
  %114 = vdwg.mxu0
  %115 = vst [vmem:[#allocation2] sm:$0xff] %v96
  %116 = vst [vmem:[#allocation2 + $0x8] sm:$0xff] %v98
  %117 = vst [vmem:[#allocation2 + $0x10] sm:$0xff] %v101
  %118 = vst [vmem:[#allocation2 + $0x18] sm:$0xff] %v103
  %119 = vst [vmem:[#allocation2 + $0x20] sm:$0xff] %v106
  %120 = vst [vmem:[#allocation2 + $0x28] sm:$0xff] %v108
  %121 = vst [vmem:[#allocation2 + $0x30] sm:$0xff] %v111
  %122 = vst [vmem:[#allocation2 + $0x38] sm:$0xff] %v113
  %v123 = vld [vmem:[#allocation2] sm:$0xff]
  %v124 = vld [vmem:[%s2] sm:$0xf]
  %v125 = vld [vmem:[%s2 + $0x4] sm:$0xf]
  %v126 = vld [vmem:[%s2 + $0x8] sm:$0xf]
  %v127 = vld [vmem:[%s2 + $0xc] sm:$0xf]
  %v132 = vunpack.c.l.b16 %v124
  %v133 = vunpack.c.l.b16 %v125
  %v134 = vunpack.c.l.b16 %v126
  %v135 = vunpack.c.l.b16 %v127
  %v136 = vpack.c.b16 %v133, %v132
  %v137 = vpack.c.b16 %v135, %v134
  %vm140 = vcmask 261120
  %v142 = vsel %vm140, 0, 0
  %144 = vmatpush.bf16.msra.mxu0 0
  %145 = vmatpush.bf16.msra.mxu0 0
  %146 = vmatpush.bf16.msra.mxu0 0
  %147 = vmatpush.bf16.msra.mxu0 0
  %148 = vmatpush.bf16.msra.mxu0 0
  %149 = vmatpush.bf16.msra.mxu0 0
  %150 = vmatpush.bf16.msra.mxu0 %v137
  %151 = vmatpush.bf16.msra.mxu0 %v136
  %152 = vmatmul.bf16.gmra.mxu0 %v142
  %v153 = vpop.f32.mrf.mxu0
  %v154 = vadd.f32 0.0, %v153
  %v155 = vpop.f32.mrf.mxu0
  %156 = vdwg.mxu0
  %v157 = vadd.f32 %v123, %v154
  %v158 = vxor.u32 %v157, 2147483648
  %v159 = vmul.f32 %v158, 1.442695
  %v160 = vpow.pop %v159
  %v161 = vadd.f32 %v160, 1.0
  %v162 = vrcp.pop %v161
  %v163 = vmul.f32 %v161, %v162
  %v164 = vsub.f32 1.0, %v163
  %v165 = vmul.f32 %v162, %v164
  %v166 = vadd.f32 %v162, %v165
  %vm167 = vweird.f32 %v161
  %vm168 = vweird.f32 %v162
  %vm169 = vmor %vm167, %vm168
  %v170 = vsel %vm169, %v162, %v166
  %v171 = vand.u32 2147483647, %v161
  %vm172 = vcmp.eq.f32.partialorder %v171, 8.507059e+37
  %v173 = vand.u32 %v161, 2147483648
  %v174 = vor.u32 1.1754944e-38, %v173
  %v175 = vsel %vm172, %v174, %v170
  %v176 = vmul.f32 1.0, %v175
  %v177 = vtanh.pop %v157
  %v178 = vmul.f32 %v176, 0.0
  %180 = vrot.lane.b32.xlu0 %v177, 32
  %v181 = vpop.permute.xlu0 %180
  %v183 = vmul.f32 %v176, %v181
  %185 = vrot.lane.b32.xlu0 %v183, 32
  %v186 = vpop.permute.xlu0 %185
  %v188 = vadd.f32 %v178, %v186
  %v189 = vtanh.pop %v188
  %191 = vrot.lane.b32.xlu0 %v189, 32
  %v192 = vpop.permute.xlu0 %191
  %v194 = vmul.f32 %v176, %v192
  %196 = vrot.lane.b32.xlu0 %v194, 64
  %v197 = vpop.permute.xlu0 %196
  %199 = vst.msk [vmem:[#allocation3] sm:$0xff] %vm140, %v197
  %s200 = scalar_lea.vmem [#allocation2], 8
  %v201 = vld [vmem:[%s200] sm:$0xff]
  %v202 = vpack.c.bf16 %v194, %v194
  %v203 = vld [vmem:[%s2] sm:$0xf]
  %v204 = vld [vmem:[%s2 + $0x4] sm:$0xf]
  %v205 = vld [vmem:[%s2 + $0x8] sm:$0xf]
  %v206 = vld [vmem:[%s2 + $0xc] sm:$0xf]
  %208 = vrot.lane.b32.xlu0 %v202, 64
  %v209 = vpop.permute.xlu0 %208
  %v214 = vunpack.c.l.b16 %v203
  %v215 = vunpack.c.l.b16 %v204
  %v216 = vunpack.c.l.b16 %v205
  %v217 = vunpack.c.l.b16 %v206
  %v218 = vpack.c.b16 %v215, %v214
  %v219 = vpack.c.b16 %v217, %v216
  %v223 = vsel %vm140, %v209, 0
  %225 = vmatpush.bf16.msra.mxu0 0
  %226 = vmatpush.bf16.msra.mxu0 0
  %227 = vmatpush.bf16.msra.mxu0 0
  %228 = vmatpush.bf16.msra.mxu0 0
  %229 = vmatpush.bf16.msra.mxu0 0
  %230 = vmatpush.bf16.msra.mxu0 0
  %231 = vmatpush.bf16.msra.mxu0 %v219
  %232 = vmatpush.bf16.msra.mxu0 %v218
  %233 = vmatmul.bf16.gmra.mxu0 %v223
  %v234 = vpop.f32.mrf.mxu0
  %v235 = vadd.f32 0.0, %v234
  %v236 = vpop.f32.mrf.mxu0
  %237 = vdwg.mxu0
  %v238 = vadd.f32 %v201, %v235
  %v239 = vxor.u32 %v238, 2147483648
  %v240 = vmul.f32 %v239, 1.442695
  %v241 = vpow.pop %v240
  %v242 = vadd.f32 %v241, 1.0
  %v243 = vrcp.pop %v242
  %v244 = vmul.f32 %v242, %v243
  %v245 = vsub.f32 1.0, %v244
  %v246 = vmul.f32 %v243, %v245
  %v247 = vadd.f32 %v243, %v246
  %vm248 = vweird.f32 %v242
  %vm249 = vweird.f32 %v243
  %vm250 = vmor %vm248, %vm249
  %v251 = vsel %vm250, %v243, %v247
  %v252 = vand.u32 2147483647, %v242
  %vm253 = vcmp.eq.f32.partialorder %v252, 8.507059e+37
  %v254 = vand.u32 %v242, 2147483648
  %v255 = vor.u32 1.1754944e-38, %v254
  %v256 = vsel %vm253, %v255, %v251
  %v257 = vmul.f32 1.0, %v256
  %v258 = vtanh.pop %v238
  %v259 = vmul.f32 %v257, %v188
  %261 = vrot.lane.b32.xlu0 %v258, 32
  %v262 = vpop.permute.xlu0 %261
  %v264 = vmul.f32 %v257, %v262
  %266 = vrot.lane.b32.xlu0 %v264, 32
  %v267 = vpop.permute.xlu0 %266
  %v269 = vadd.f32 %v259, %v267
  %v270 = vtanh.pop %v269
  %272 = vrot.lane.b32.xlu0 %v270, 32
  %v273 = vpop.permute.xlu0 %272
  %v275 = vmul.f32 %v257, %v273
  %277 = vrot.lane.b32.xlu0 %v275, 64
  %v278 = vpop.permute.xlu0 %277
  %s280 = scalar_lea.vmem [#allocation3], 8
  %281 = vst.msk [vmem:[%s280] sm:$0xff] %vm140, %v278
  %s282 = scalar_lea.vmem [#allocation2], 16
  %v283 = vld [vmem:[%s282] sm:$0xff]
  %v284 = vpack.c.bf16 %v275, %v275
  %v285 = vld [vmem:[%s2] sm:$0xf]
  %v286 = vld [vmem:[%s2 + $0x4] sm:$0xf]
  %v287 = vld [vmem:[%s2 + $0x8] sm:$0xf]
  %v288 = vld [vmem:[%s2 + $0xc] sm:$0xf]
  %290 = vrot.lane.b32.xlu0 %v284, 64
  %v291 = vpop.permute.xlu0 %290
  %v296 = vunpack.c.l.b16 %v285
  %v297 = vunpack.c.l.b16 %v286
  %v298 = vunpack.c.l.b16 %v287
  %v299 = vunpack.c.l.b16 %v288
  %v300 = vpack.c.b16 %v297, %v296
  %v301 = vpack.c.b16 %v299, %v298
  %v305 = vsel %vm140, %v291, 0
  %307 = vmatpush.bf16.msra.mxu0 0
  %308 = vmatpush.bf16.msra.mxu0 0
  %309 = vmatpush.bf16.msra.mxu0 0
  %310 = vmatpush.bf16.msra.mxu0 0
  %311 = vmatpush.bf16.msra.mxu0 0
  %312 = vmatpush.bf16.msra.mxu0 0
  %313 = vmatpush.bf16.msra.mxu0 %v301
  %314 = vmatpush.bf16.msra.mxu0 %v300
  %315 = vmatmul.bf16.gmra.mxu0 %v305
  %v316 = vpop.f32.mrf.mxu0
  %v317 = vadd.f32 0.0, %v316
  %v318 = vpop.f32.mrf.mxu0
  %319 = vdwg.mxu0
  %v320 = vadd.f32 %v283, %v317
  %v321 = vxor.u32 %v320, 2147483648
  %v322 = vmul.f32 %v321, 1.442695
  %v323 = vpow.pop %v322
  %v324 = vadd.f32 %v323, 1.0
  %v325 = vrcp.pop %v324
  %v326 = vmul.f32 %v324, %v325
  %v327 = vsub.f32 1.0, %v326
  %v328 = vmul.f32 %v325, %v327
  %v329 = vadd.f32 %v325, %v328
  %vm330 = vweird.f32 %v324
  %vm331 = vweird.f32 %v325
  %vm332 = vmor %vm330, %vm331
  %v333 = vsel %vm332, %v325, %v329
  %v334 = vand.u32 2147483647, %v324
  %vm335 = vcmp.eq.f32.partialorder %v334, 8.507059e+37
  %v336 = vand.u32 %v324, 2147483648
  %v337 = vor.u32 1.1754944e-38, %v336
  %v338 = vsel %vm335, %v337, %v333
  %v339 = vmul.f32 1.0, %v338
  %v340 = vtanh.pop %v320
  %v341 = vmul.f32 %v339, %v269
  %343 = vrot.lane.b32.xlu0 %v340, 32
  %v344 = vpop.permute.xlu0 %343
  %v346 = vmul.f32 %v339, %v344
  %348 = vrot.lane.b32.xlu0 %v346, 32
  %v349 = vpop.permute.xlu0 %348
  %v351 = vadd.f32 %v341, %v349
  %v352 = vtanh.pop %v351
  %354 = vrot.lane.b32.xlu0 %v352, 32
  %v355 = vpop.permute.xlu0 %354
  %v357 = vmul.f32 %v339, %v355
  %359 = vrot.lane.b32.xlu0 %v357, 64
  %v360 = vpop.permute.xlu0 %359
  %s362 = scalar_lea.vmem [#allocation3], 16
  %363 = vst.msk [vmem:[%s362] sm:$0xff] %vm140, %v360
  %s364 = scalar_lea.vmem [#allocation2], 24
  %v365 = vld [vmem:[%s364] sm:$0xff]
  %v366 = vpack.c.bf16 %v357, %v357
  %v367 = vld [vmem:[%s2] sm:$0xf]
  %v368 = vld [vmem:[%s2 + $0x4] sm:$0xf]
  %v369 = vld [vmem:[%s2 + $0x8] sm:$0xf]
  %v370 = vld [vmem:[%s2 + $0xc] sm:$0xf]
  %372 = vrot.lane.b32.xlu0 %v366, 64
  %v373 = vpop.permute.xlu0 %372
  %v378 = vunpack.c.l.b16 %v367
  %v379 = vunpack.c.l.b16 %v368
  %v380 = vunpack.c.l.b16 %v369
  %v381 = vunpack.c.l.b16 %v370
  %v382 = vpack.c.b16 %v379, %v378
  %v383 = vpack.c.b16 %v381, %v380
  %v387 = vsel %vm140, %v373, 0
  %389 = vmatpush.bf16.msra.mxu0 0
  %390 = vmatpush.bf16.msra.mxu0 0
  %391 = vmatpush.bf16.msra.mxu0 0
  %392 = vmatpush.bf16.msra.mxu0 0
  %393 = vmatpush.bf16.msra.mxu0 0
  %394 = vmatpush.bf16.msra.mxu0 0
  %395 = vmatpush.bf16.msra.mxu0 %v383
  %396 = vmatpush.bf16.msra.mxu0 %v382
  %397 = vmatmul.bf16.gmra.mxu0 %v387
  %v398 = vpop.f32.mrf.mxu0
  %v399 = vadd.f32 0.0, %v398
  %v400 = vpop.f32.mrf.mxu0
  %401 = vdwg.mxu0
  %v402 = vadd.f32 %v365, %v399
  %v403 = vxor.u32 %v402, 2147483648
  %v404 = vmul.f32 %v403, 1.442695
  %v405 = vpow.pop %v404
  %v406 = vadd.f32 %v405, 1.0
  %v407 = vrcp.pop %v406
  %v408 = vmul.f32 %v406, %v407
  %v409 = vsub.f32 1.0, %v408
  %v410 = vmul.f32 %v407, %v409
  %v411 = vadd.f32 %v407, %v410
  %vm412 = vweird.f32 %v406
  %vm413 = vweird.f32 %v407
  %vm414 = vmor %vm412, %vm413
  %v415 = vsel %vm414, %v407, %v411
  %v416 = vand.u32 2147483647, %v406
  %vm417 = vcmp.eq.f32.partialorder %v416, 8.507059e+37
  %v418 = vand.u32 %v406, 2147483648
  %v419 = vor.u32 1.1754944e-38, %v418
  %v420 = vsel %vm417, %v419, %v415
  %v421 = vmul.f32 1.0, %v420
  %v422 = vtanh.pop %v402
  %v423 = vmul.f32 %v421, %v351
  %425 = vrot.lane.b32.xlu0 %v422, 32
  %v426 = vpop.permute.xlu0 %425
  %v428 = vmul.f32 %v421, %v426
  %430 = vrot.lane.b32.xlu0 %v428, 32
  %v431 = vpop.permute.xlu0 %430
  %v433 = vadd.f32 %v423, %v431
  %v434 = vtanh.pop %v433
  %436 = vrot.lane.b32.xlu0 %v434, 32
  %v437 = vpop.permute.xlu0 %436
  %v439 = vmul.f32 %v421, %v437
  %441 = vrot.lane.b32.xlu0 %v439, 64
  %v442 = vpop.permute.xlu0 %441
  %s444 = scalar_lea.vmem [#allocation3], 24
  %445 = vst.msk [vmem:[%s444] sm:$0xff] %vm140, %v442
  %s446 = scalar_lea.vmem [#allocation2], 32
  %v447 = vld [vmem:[%s446] sm:$0xff]
  %v448 = vpack.c.bf16 %v439, %v439
  %v449 = vld [vmem:[%s2] sm:$0xf]
  %v450 = vld [vmem:[%s2 + $0x4] sm:$0xf]
  %v451 = vld [vmem:[%s2 + $0x8] sm:$0xf]
  %v452 = vld [vmem:[%s2 + $0xc] sm:$0xf]
  %454 = vrot.lane.b32.xlu0 %v448, 64
  %v455 = vpop.permute.xlu0 %454
  %v460 = vunpack.c.l.b16 %v449
  %v461 = vunpack.c.l.b16 %v450
  %v462 = vunpack.c.l.b16 %v451
  %v463 = vunpack.c.l.b16 %v452
  %v464 = vpack.c.b16 %v461, %v460
  %v465 = vpack.c.b16 %v463, %v462
  %v469 = vsel %vm140, %v455, 0
  %471 = vmatpush.bf16.msra.mxu0 0
  %472 = vmatpush.bf16.msra.mxu0 0
  %473 = vmatpush.bf16.msra.mxu0 0
  %474 = vmatpush.bf16.msra.mxu0 0
  %475 = vmatpush.bf16.msra.mxu0 0
  %476 = vmatpush.bf16.msra.mxu0 0
  %477 = vmatpush.bf16.msra.mxu0 %v465
  %478 = vmatpush.bf16.msra.mxu0 %v464
  %479 = vmatmul.bf16.gmra.mxu0 %v469
  %v480 = vpop.f32.mrf.mxu0
  %v481 = vadd.f32 0.0, %v480
  %v482 = vpop.f32.mrf.mxu0
  %483 = vdwg.mxu0
  %v484 = vadd.f32 %v447, %v481
  %v485 = vxor.u32 %v484, 2147483648
  %v486 = vmul.f32 %v485, 1.442695
  %v487 = vpow.pop %v486
  %v488 = vadd.f32 %v487, 1.0
  %v489 = vrcp.pop %v488
  %v490 = vmul.f32 %v488, %v489
  %v491 = vsub.f32 1.0, %v490
  %v492 = vmul.f32 %v489, %v491
  %v493 = vadd.f32 %v489, %v492
  %vm494 = vweird.f32 %v488
  %vm495 = vweird.f32 %v489
  %vm496 = vmor %vm494, %vm495
  %v497 = vsel %vm496, %v489, %v493
  %v498 = vand.u32 2147483647, %v488
  %vm499 = vcmp.eq.f32.partialorder %v498, 8.507059e+37
  %v500 = vand.u32 %v488, 2147483648
  %v501 = vor.u32 1.1754944e-38, %v500
  %v502 = vsel %vm499, %v501, %v497
  %v503 = vmul.f32 1.0, %v502
  %v504 = vtanh.pop %v484
  %v505 = vmul.f32 %v503, %v433
  %507 = vrot.lane.b32.xlu0 %v504, 32
  %v508 = vpop.permute.xlu0 %507
  %v510 = vmul.f32 %v503, %v508
  %512 = vrot.lane.b32.xlu0 %v510, 32
  %v513 = vpop.permute.xlu0 %512
  %v515 = vadd.f32 %v505, %v513
  %v516 = vtanh.pop %v515
  %518 = vrot.lane.b32.xlu0 %v516, 32
  %v519 = vpop.permute.xlu0 %518
  %v521 = vmul.f32 %v503, %v519
  %523 = vrot.lane.b32.xlu0 %v521, 64
  %v524 = vpop.permute.xlu0 %523
  %s526 = scalar_lea.vmem [#allocation3], 32
  %527 = vst.msk [vmem:[%s526] sm:$0xff] %vm140, %v524
  %s528 = scalar_lea.vmem [#allocation2], 40
  %v529 = vld [vmem:[%s528] sm:$0xff]
  %v530 = vpack.c.bf16 %v521, %v521
  %v531 = vld [vmem:[%s2] sm:$0xf]
  %v532 = vld [vmem:[%s2 + $0x4] sm:$0xf]
  %v533 = vld [vmem:[%s2 + $0x8] sm:$0xf]
  %v534 = vld [vmem:[%s2 + $0xc] sm:$0xf]
  %536 = vrot.lane.b32.xlu0 %v530, 64
  %v537 = vpop.permute.xlu0 %536
  %v542 = vunpack.c.l.b16 %v531
  %v543 = vunpack.c.l.b16 %v532
  %v544 = vunpack.c.l.b16 %v533
  %v545 = vunpack.c.l.b16 %v534
  %v546 = vpack.c.b16 %v543, %v542
  %v547 = vpack.c.b16 %v545, %v544
  %v551 = vsel %vm140, %v537, 0
  %553 = vmatpush.bf16.msra.mxu0 0
  %554 = vmatpush.bf16.msra.mxu0 0
  %555 = vmatpush.bf16.msra.mxu0 0
  %556 = vmatpush.bf16.msra.mxu0 0
  %557 = vmatpush.bf16.msra.mxu0 0
  %558 = vmatpush.bf16.msra.mxu0 0
  %559 = vmatpush.bf16.msra.mxu0 %v547
  %560 = vmatpush.bf16.msra.mxu0 %v546
  %561 = vmatmul.bf16.gmra.mxu0 %v551
  %v562 = vpop.f32.mrf.mxu0
  %v563 = vadd.f32 0.0, %v562
  %v564 = vpop.f32.mrf.mxu0
  %565 = vdwg.mxu0
  %v566 = vadd.f32 %v529, %v563
  %v567 = vxor.u32 %v566, 2147483648
  %v568 = vmul.f32 %v567, 1.442695
  %v569 = vpow.pop %v568
  %v570 = vadd.f32 %v569, 1.0
  %v571 = vrcp.pop %v570
  %v572 = vmul.f32 %v570, %v571
  %v573 = vsub.f32 1.0, %v572
  %v574 = vmul.f32 %v571, %v573
  %v575 = vadd.f32 %v571, %v574
  %vm576 = vweird.f32 %v570
  %vm577 = vweird.f32 %v571
  %vm578 = vmor %vm576, %vm577
  %v579 = vsel %vm578, %v571, %v575
  %v580 = vand.u32 2147483647, %v570
  %vm581 = vcmp.eq.f32.partialorder %v580, 8.507059e+37
  %v582 = vand.u32 %v570, 2147483648
  %v583 = vor.u32 1.1754944e-38, %v582
  %v584 = vsel %vm581, %v583, %v579
  %v585 = vmul.f32 1.0, %v584
  %v586 = vtanh.pop %v566
  %v587 = vmul.f32 %v585, %v515
  %589 = vrot.lane.b32.xlu0 %v586, 32
  %v590 = vpop.permute.xlu0 %589
  %v592 = vmul.f32 %v585, %v590
  %594 = vrot.lane.b32.xlu0 %v592, 32
  %v595 = vpop.permute.xlu0 %594
  %v597 = vadd.f32 %v587, %v595
  %v598 = vtanh.pop %v597
  %600 = vrot.lane.b32.xlu0 %v598, 32
  %v601 = vpop.permute.xlu0 %600
  %v603 = vmul.f32 %v585, %v601
  %605 = vrot.lane.b32.xlu0 %v603, 64
  %v606 = vpop.permute.xlu0 %605
  %s608 = scalar_lea.vmem [#allocation3], 40
  %609 = vst.msk [vmem:[%s608] sm:$0xff] %vm140, %v606
  %s610 = scalar_lea.vmem [#allocation2], 48
  %v611 = vld [vmem:[%s610] sm:$0xff]
  %v612 = vpack.c.bf16 %v603, %v603
  %v613 = vld [vmem:[%s2] sm:$0xf]
  %v614 = vld [vmem:[%s2 + $0x4] sm:$0xf]
  %v615 = vld [vmem:[%s2 + $0x8] sm:$0xf]
  %v616 = vld [vmem:[%s2 + $0xc] sm:$0xf]
  %618 = vrot.lane.b32.xlu0 %v612, 64
  %v619 = vpop.permute.xlu0 %618
  %v624 = vunpack.c.l.b16 %v613
  %v625 = vunpack.c.l.b16 %v614
  %v626 = vunpack.c.l.b16 %v615
  %v627 = vunpack.c.l.b16 %v616
  %v628 = vpack.c.b16 %v625, %v624
  %v629 = vpack.c.b16 %v627, %v626
  %v633 = vsel %vm140, %v619, 0
  %635 = vmatpush.bf16.msra.mxu0 0
  %636 = vmatpush.bf16.msra.mxu0 0
  %637 = vmatpush.bf16.msra.mxu0 0
  %638 = vmatpush.bf16.msra.mxu0 0
  %639 = vmatpush.bf16.msra.mxu0 0
  %640 = vmatpush.bf16.msra.mxu0 0
  %641 = vmatpush.bf16.msra.mxu0 %v629
  %642 = vmatpush.bf16.msra.mxu0 %v628
  %643 = vmatmul.bf16.gmra.mxu0 %v633
  %v644 = vpop.f32.mrf.mxu0
  %v645 = vadd.f32 0.0, %v644
  %v646 = vpop.f32.mrf.mxu0
  %647 = vdwg.mxu0
  %v648 = vadd.f32 %v611, %v645
  %v649 = vxor.u32 %v648, 2147483648
  %v650 = vmul.f32 %v649, 1.442695
  %v651 = vpow.pop %v650
  %v652 = vadd.f32 %v651, 1.0
  %v653 = vrcp.pop %v652
  %v654 = vmul.f32 %v652, %v653
  %v655 = vsub.f32 1.0, %v654
  %v656 = vmul.f32 %v653, %v655
  %v657 = vadd.f32 %v653, %v656
  %vm658 = vweird.f32 %v652
  %vm659 = vweird.f32 %v653
  %vm660 = vmor %vm658, %vm659
  %v661 = vsel %vm660, %v653, %v657
  %v662 = vand.u32 2147483647, %v652
  %vm663 = vcmp.eq.f32.partialorder %v662, 8.507059e+37
  %v664 = vand.u32 %v652, 2147483648
  %v665 = vor.u32 1.1754944e-38, %v664
  %v666 = vsel %vm663, %v665, %v661
  %v667 = vmul.f32 1.0, %v666
  %v668 = vtanh.pop %v648
  %v669 = vmul.f32 %v667, %v597
  %671 = vrot.lane.b32.xlu0 %v668, 32
  %v672 = vpop.permute.xlu0 %671
  %v674 = vmul.f32 %v667, %v672
  %676 = vrot.lane.b32.xlu0 %v674, 32
  %v677 = vpop.permute.xlu0 %676
  %v679 = vadd.f32 %v669, %v677
  %v680 = vtanh.pop %v679
  %682 = vrot.lane.b32.xlu0 %v680, 32
  %v683 = vpop.permute.xlu0 %682
  %v685 = vmul.f32 %v667, %v683
  %687 = vrot.lane.b32.xlu0 %v685, 64
  %v688 = vpop.permute.xlu0 %687
  %s690 = scalar_lea.vmem [#allocation3], 48
  %691 = vst.msk [vmem:[%s690] sm:$0xff] %vm140, %v688
  %s692 = scalar_lea.vmem [#allocation2], 56
  %v693 = vld [vmem:[%s692] sm:$0xff]
  %v694 = vpack.c.bf16 %v685, %v685
  %v695 = vld [vmem:[%s2] sm:$0xf]
  %v696 = vld [vmem:[%s2 + $0x4] sm:$0xf]
  %v697 = vld [vmem:[%s2 + $0x8] sm:$0xf]
  %v698 = vld [vmem:[%s2 + $0xc] sm:$0xf]
  %700 = vrot.lane.b32.xlu0 %v694, 64
  %v701 = vpop.permute.xlu0 %700
  %v706 = vunpack.c.l.b16 %v695
  %v707 = vunpack.c.l.b16 %v696
  %v708 = vunpack.c.l.b16 %v697
  %v709 = vunpack.c.l.b16 %v698
  %v710 = vpack.c.b16 %v707, %v706
  %v711 = vpack.c.b16 %v709, %v708
  %v715 = vsel %vm140, %v701, 0
  %717 = vmatpush.bf16.msra.mxu0 0
  %718 = vmatpush.bf16.msra.mxu0 0
  %719 = vmatpush.bf16.msra.mxu0 0
  %720 = vmatpush.bf16.msra.mxu0 0
  %721 = vmatpush.bf16.msra.mxu0 0
  %722 = vmatpush.bf16.msra.mxu0 0
  %723 = vmatpush.bf16.msra.mxu0 %v711
  %724 = vmatpush.bf16.msra.mxu0 %v710
  %725 = vmatmul.bf16.gmra.mxu0 %v715
  %v726 = vpop.f32.mrf.mxu0
  %v727 = vadd.f32 0.0, %v726
  %v728 = vpop.f32.mrf.mxu0
  %729 = vdwg.mxu0
  %v730 = vadd.f32 %v693, %v727
  %v731 = vxor.u32 %v730, 2147483648
  %v732 = vmul.f32 %v731, 1.442695
  %v733 = vpow.pop %v732
  %v734 = vadd.f32 %v733, 1.0
  %v735 = vrcp.pop %v734
  %v736 = vmul.f32 %v734, %v735
  %v737 = vsub.f32 1.0, %v736
  %v738 = vmul.f32 %v735, %v737
  %v739 = vadd.f32 %v735, %v738
  %vm740 = vweird.f32 %v734
  %vm741 = vweird.f32 %v735
  %vm742 = vmor %vm740, %vm741
  %v743 = vsel %vm742, %v735, %v739
  %v744 = vand.u32 2147483647, %v734
  %vm745 = vcmp.eq.f32.partialorder %v744, 8.507059e+37
  %v746 = vand.u32 %v734, 2147483648
  %v747 = vor.u32 1.1754944e-38, %v746
  %v748 = vsel %vm745, %v747, %v743
  %v749 = vmul.f32 1.0, %v748
  %v750 = vtanh.pop %v730
  %v751 = vmul.f32 %v749, %v679
  %753 = vrot.lane.b32.xlu0 %v750, 32
  %v754 = vpop.permute.xlu0 %753
  %v756 = vmul.f32 %v749, %v754
  %758 = vrot.lane.b32.xlu0 %v756, 32
  %v759 = vpop.permute.xlu0 %758
  %v761 = vadd.f32 %v751, %v759
  %v762 = vtanh.pop %v761
  %764 = vrot.lane.b32.xlu0 %v762, 32
  %v765 = vpop.permute.xlu0 %764
  %v767 = vmul.f32 %v749, %v765
  %769 = vrot.lane.b32.xlu0 %v767, 64
  %v770 = vpop.permute.xlu0 %769
  %s772 = scalar_lea.vmem [#allocation3], 56
  %773 = vst.msk [vmem:[%s772] sm:$0xff] %vm140, %v770
  %v774 = vld [vmem:[#allocation3] sm:$0xff]
  %v775 = vld [vmem:[#allocation3 + $0x8] sm:$0xff]
  %v776 = vld [vmem:[#allocation3 + $0x10] sm:$0xff]
  %v777 = vld [vmem:[#allocation3 + $0x18] sm:$0xff]
  %v778 = vld [vmem:[#allocation3 + $0x20] sm:$0xff]
  %v779 = vld [vmem:[#allocation3 + $0x28] sm:$0xff]
  %v780 = vld [vmem:[#allocation3 + $0x30] sm:$0xff]
  %v781 = vld [vmem:[#allocation3 + $0x38] sm:$0xff]
  %v782 = vpack.c.bf16 %v775, %v774
  %v783 = vpack.c.bf16 %v777, %v776
  %v784 = vpack.c.bf16 %v779, %v778
  %v785 = vpack.c.bf16 %v781, %v780
  %v786 = vld [vmem:[%s4] sm:$0xf]
  %v787 = vld [vmem:[%s4 + $0x4] sm:$0xf]
  %v788 = vld [vmem:[%s4 + $0x8] sm:$0xf]
  %v789 = vld [vmem:[%s4 + $0xc] sm:$0xf]
  %v790 = vld [vmem:[%s6] sm:$0x1]
  %v792 = vperm.slane %v790, 0
  %v798 = vunpack.c.l.b16 %v786
  %v799 = vunpack.c.l.b16 %v787
  %v800 = vunpack.c.l.b16 %v788
  %v801 = vunpack.c.l.b16 %v789
  %v802 = vpack.c.b16 %v799, %v798
  %v803 = vpack.c.b16 %v801, %v800
  %v807 = vsel %vm140, %v782, 0
  %v810 = vsel %vm140, %v783, 0
  %v813 = vsel %vm140, %v784, 0
  %v816 = vsel %vm140, %v785, 0
  %818 = vmatpush.bf16.msra.mxu0 0
  %819 = vmatpush.bf16.msra.mxu0 0
  %820 = vmatpush.bf16.msra.mxu0 0
  %821 = vmatpush.bf16.msra.mxu0 0
  %822 = vmatpush.bf16.msra.mxu0 0
  %823 = vmatpush.bf16.msra.mxu0 0
  %824 = vmatpush.bf16.msra.mxu0 %v803
  %825 = vmatpush.bf16.msra.mxu0 %v802
  %826 = vmatmul.bf16.gmra.mxu0 %v807
  %v827 = vpop.f32.mrf.mxu0
  %v828 = vadd.f32 %v792, %v827
  %v829 = vpop.f32.mrf.mxu0
  %v830 = vadd.f32 %v792, %v829
  %831 = vmatmul.bf16.gmra.mxu0 %v810
  %v832 = vpop.f32.mrf.mxu0
  %v833 = vadd.f32 %v792, %v832
  %v834 = vpop.f32.mrf.mxu0
  %v835 = vadd.f32 %v792, %v834
  %836 = vmatmul.bf16.gmra.mxu0 %v813
  %v837 = vpop.f32.mrf.mxu0
  %v838 = vadd.f32 %v792, %v837
  %v839 = vpop.f32.mrf.mxu0
  %v840 = vadd.f32 %v792, %v839
  %841 = vmatmul.bf16.gmra.mxu0 %v816
  %v842 = vpop.f32.mrf.mxu0
  %v843 = vadd.f32 %v792, %v842
  %v844 = vpop.f32.mrf.mxu0
  %v845 = vadd.f32 %v792, %v844
  %846 = vdwg.mxu0
  %847 = vst [vmem:[#allocation2] sm:$0xff] %v828
  %848 = vst [vmem:[#allocation2 + $0x8] sm:$0xff] %v830
  %849 = vst [vmem:[#allocation2 + $0x10] sm:$0xff] %v833
  %850 = vst [vmem:[#allocation2 + $0x18] sm:$0xff] %v835
  %851 = vst [vmem:[#allocation2 + $0x20] sm:$0xff] %v838
  %852 = vst [vmem:[#allocation2 + $0x28] sm:$0xff] %v840
  %853 = vst [vmem:[#allocation2 + $0x30] sm:$0xff] %v843
  %854 = vst [vmem:[#allocation2 + $0x38] sm:$0xff] %v845
  %v855 = vld [vmem:[#allocation2] sm:$0xff]
  %v856 = vld [vmem:[%s5] sm:$0xf]
  %v857 = vld [vmem:[%s5 + $0x4] sm:$0xf]
  %v858 = vld [vmem:[%s5 + $0x8] sm:$0xf]
  %v859 = vld [vmem:[%s5 + $0xc] sm:$0xf]
  %v864 = vunpack.c.l.b16 %v856
  %v865 = vunpack.c.l.b16 %v857
  %v866 = vunpack.c.l.b16 %v858
  %v867 = vunpack.c.l.b16 %v859
  %v868 = vpack.c.b16 %v865, %v864
  %v869 = vpack.c.b16 %v867, %v866
  %872 = vmatpush.bf16.msra.mxu0 0
  %873 = vmatpush.bf16.msra.mxu0 0
  %874 = vmatpush.bf16.msra.mxu0 0
  %875 = vmatpush.bf16.msra.mxu0 0
  %876 = vmatpush.bf16.msra.mxu0 0
  %877 = vmatpush.bf16.msra.mxu0 0
  %878 = vmatpush.bf16.msra.mxu0 %v869
  %879 = vmatpush.bf16.msra.mxu0 %v868
  %880 = vmatmul.bf16.gmra.mxu0 %v142
  %v881 = vpop.f32.mrf.mxu0
  %v882 = vadd.f32 0.0, %v881
  %v883 = vpop.f32.mrf.mxu0
  %884 = vdwg.mxu0
  %v885 = vadd.f32 %v855, %v882
  %v886 = vxor.u32 %v885, 2147483648
  %v887 = vmul.f32 %v886, 1.442695
  %v888 = vpow.pop %v887
  %v889 = vadd.f32 %v888, 1.0
  %v890 = vrcp.pop %v889
  %v891 = vmul.f32 %v889, %v890
  %v892 = vsub.f32 1.0, %v891
  %v893 = vmul.f32 %v890, %v892
  %v894 = vadd.f32 %v890, %v893
  %vm895 = vweird.f32 %v889
  %vm896 = vweird.f32 %v890
  %vm897 = vmor %vm895, %vm896
  %v898 = vsel %vm897, %v890, %v894
  %v899 = vand.u32 2147483647, %v889
  %vm900 = vcmp.eq.f32.partialorder %v899, 8.507059e+37
  %v901 = vand.u32 %v889, 2147483648
  %v902 = vor.u32 1.1754944e-38, %v901
  %v903 = vsel %vm900, %v902, %v898
  %v904 = vmul.f32 1.0, %v903
  %v905 = vtanh.pop %v885
  %v906 = vmul.f32 %v904, 0.0
  %908 = vrot.lane.b32.xlu0 %v905, 32
  %v909 = vpop.permute.xlu0 %908
  %v911 = vmul.f32 %v904, %v909
  %913 = vrot.lane.b32.xlu0 %v911, 32
  %v914 = vpop.permute.xlu0 %913
  %v916 = vadd.f32 %v906, %v914
  %v917 = vtanh.pop %v916
  %919 = vrot.lane.b32.xlu0 %v917, 32
  %v920 = vpop.permute.xlu0 %919
  %v922 = vmul.f32 %v904, %v920
  %v923 = vld [vmem:[%s200] sm:$0xff]
  %v924 = vpack.c.bf16 %v922, %v922
  %926 = vrot.lane.b32.xlu0 %v924, 64
  %v927 = vpop.permute.xlu0 %926
  %v929 = vsel %vm140, %v927, 0
  %931 = vmatpush.bf16.msra.mxu0 0
  %932 = vmatpush.bf16.msra.mxu0 0
  %933 = vmatpush.bf16.msra.mxu0 0
  %934 = vmatpush.bf16.msra.mxu0 0
  %935 = vmatpush.bf16.msra.mxu0 0
  %936 = vmatpush.bf16.msra.mxu0 0
  %937 = vmatpush.bf16.msra.mxu0 %v869
  %938 = vmatpush.bf16.msra.mxu0 %v868
  %939 = vmatmul.bf16.gmra.mxu0 %v929
  %v940 = vpop.f32.mrf.mxu0
  %v941 = vadd.f32 0.0, %v940
  %v942 = vpop.f32.mrf.mxu0
  %943 = vdwg.mxu0
  %v944 = vadd.f32 %v923, %v941
  %v945 = vxor.u32 %v944, 2147483648
  %v946 = vmul.f32 %v945, 1.442695
  %v947 = vpow.pop %v946
  %v948 = vadd.f32 %v947, 1.0
  %v949 = vrcp.pop %v948
  %v950 = vmul.f32 %v948, %v949
  %v951 = vsub.f32 1.0, %v950
  %v952 = vmul.f32 %v949, %v951
  %v953 = vadd.f32 %v949, %v952
  %vm954 = vweird.f32 %v948
  %vm955 = vweird.f32 %v949
  %vm956 = vmor %vm954, %vm955
  %v957 = vsel %vm956, %v949, %v953
  %v958 = vand.u32 2147483647, %v948
  %vm959 = vcmp.eq.f32.partialorder %v958, 8.507059e+37
  %v960 = vand.u32 %v948, 2147483648
  %v961 = vor.u32 1.1754944e-38, %v960
  %v962 = vsel %vm959, %v961, %v957
  %v963 = vmul.f32 1.0, %v962
  %v964 = vtanh.pop %v944
  %v965 = vmul.f32 %v963, %v916
  %967 = vrot.lane.b32.xlu0 %v964, 32
  %v968 = vpop.permute.xlu0 %967
  %v970 = vmul.f32 %v963, %v968
  %972 = vrot.lane.b32.xlu0 %v970, 32
  %v973 = vpop.permute.xlu0 %972
  %v975 = vadd.f32 %v965, %v973
  %v976 = vtanh.pop %v975
  %978 = vrot.lane.b32.xlu0 %v976, 32
  %v979 = vpop.permute.xlu0 %978
  %v981 = vmul.f32 %v963, %v979
  %v982 = vld [vmem:[%s282] sm:$0xff]
  %v983 = vpack.c.bf16 %v981, %v981
  %985 = vrot.lane.b32.xlu0 %v983, 64
  %v986 = vpop.permute.xlu0 %985
  %v988 = vsel %vm140, %v986, 0
  %990 = vmatpush.bf16.msra.mxu0 0
  %991 = vmatpush.bf16.msra.mxu0 0
  %992 = vmatpush.bf16.msra.mxu0 0
  %993 = vmatpush.bf16.msra.mxu0 0
  %994 = vmatpush.bf16.msra.mxu0 0
  %995 = vmatpush.bf16.msra.mxu0 0
  %996 = vmatpush.bf16.msra.mxu0 %v869
  %997 = vmatpush.bf16.msra.mxu0 %v868
  %998 = vmatmul.bf16.gmra.mxu0 %v988
  %v999 = vpop.f32.mrf.mxu0
  %v1000 = vadd.f32 0.0, %v999
  %v1001 = vpop.f32.mrf.mxu0
  %1002 = vdwg.mxu0
  %v1003 = vadd.f32 %v982, %v1000
  %v1004 = vxor.u32 %v1003, 2147483648
  %v1005 = vmul.f32 %v1004, 1.442695
  %v1006 = vpow.pop %v1005
  %v1007 = vadd.f32 %v1006, 1.0
  %v1008 = vrcp.pop %v1007
  %v1009 = vmul.f32 %v1007, %v1008
  %v1010 = vsub.f32 1.0, %v1009
  %v1011 = vmul.f32 %v1008, %v1010
  %v1012 = vadd.f32 %v1008, %v1011
  %vm1013 = vweird.f32 %v1007
  %vm1014 = vweird.f32 %v1008
  %vm1015 = vmor %vm1013, %vm1014
  %v1016 = vsel %vm1015, %v1008, %v1012
  %v1017 = vand.u32 2147483647, %v1007
  %vm1018 = vcmp.eq.f32.partialorder %v1017, 8.507059e+37
  %v1019 = vand.u32 %v1007, 2147483648
  %v1020 = vor.u32 1.1754944e-38, %v1019
  %v1021 = vsel %vm1018, %v1020, %v1016
  %v1022 = vmul.f32 1.0, %v1021
  %v1023 = vtanh.pop %v1003
  %v1024 = vmul.f32 %v1022, %v975
  %1026 = vrot.lane.b32.xlu0 %v1023, 32
  %v1027 = vpop.permute.xlu0 %1026
  %v1029 = vmul.f32 %v1022, %v1027
  %1031 = vrot.lane.b32.xlu0 %v1029, 32
  %v1032 = vpop.permute.xlu0 %1031
  %v1034 = vadd.f32 %v1024, %v1032
  %v1035 = vtanh.pop %v1034
  %1037 = vrot.lane.b32.xlu0 %v1035, 32
  %v1038 = vpop.permute.xlu0 %1037
  %v1040 = vmul.f32 %v1022, %v1038
  %v1041 = vld [vmem:[%s364] sm:$0xff]
  %v1042 = vpack.c.bf16 %v1040, %v1040
  %1044 = vrot.lane.b32.xlu0 %v1042, 64
  %v1045 = vpop.permute.xlu0 %1044
  %v1047 = vsel %vm140, %v1045, 0
  %1049 = vmatpush.bf16.msra.mxu0 0
  %1050 = vmatpush.bf16.msra.mxu0 0
  %1051 = vmatpush.bf16.msra.mxu0 0
  %1052 = vmatpush.bf16.msra.mxu0 0
  %1053 = vmatpush.bf16.msra.mxu0 0
  %1054 = vmatpush.bf16.msra.mxu0 0
  %1055 = vmatpush.bf16.msra.mxu0 %v869
  %1056 = vmatpush.bf16.msra.mxu0 %v868
  %1057 = vmatmul.bf16.gmra.mxu0 %v1047
  %v1058 = vpop.f32.mrf.mxu0
  %v1059 = vadd.f32 0.0, %v1058
  %v1060 = vpop.f32.mrf.mxu0
  %1061 = vdwg.mxu0
  %v1062 = vadd.f32 %v1041, %v1059
  %v1063 = vxor.u32 %v1062, 2147483648
  %v1064 = vmul.f32 %v1063, 1.442695
  %v1065 = vpow.pop %v1064
  %v1066 = vadd.f32 %v1065, 1.0
  %v1067 = vrcp.pop %v1066
  %v1068 = vmul.f32 %v1066, %v1067
  %v1069 = vsub.f32 1.0, %v1068
  %v1070 = vmul.f32 %v1067, %v1069
  %v1071 = vadd.f32 %v1067, %v1070
  %vm1072 = vweird.f32 %v1066
  %vm1073 = vweird.f32 %v1067
  %vm1074 = vmor %vm1072, %vm1073
  %v1075 = vsel %vm1074, %v1067, %v1071
  %v1076 = vand.u32 2147483647, %v1066
  %vm1077 = vcmp.eq.f32.partialorder %v1076, 8.507059e+37
  %v1078 = vand.u32 %v1066, 2147483648
  %v1079 = vor.u32 1.1754944e-38, %v1078
  %v1080 = vsel %vm1077, %v1079, %v1075
  %v1081 = vmul.f32 1.0, %v1080
  %v1082 = vtanh.pop %v1062
  %v1083 = vmul.f32 %v1081, %v1034
  %1085 = vrot.lane.b32.xlu0 %v1082, 32
  %v1086 = vpop.permute.xlu0 %1085
  %v1088 = vmul.f32 %v1081, %v1086
  %1090 = vrot.lane.b32.xlu0 %v1088, 32
  %v1091 = vpop.permute.xlu0 %1090
  %v1093 = vadd.f32 %v1083, %v1091
  %v1094 = vtanh.pop %v1093
  %1096 = vrot.lane.b32.xlu0 %v1094, 32
  %v1097 = vpop.permute.xlu0 %1096
  %v1099 = vmul.f32 %v1081, %v1097
  %v1100 = vld [vmem:[%s446] sm:$0xff]
  %v1101 = vpack.c.bf16 %v1099, %v1099
  %1103 = vrot.lane.b32.xlu0 %v1101, 64
  %v1104 = vpop.permute.xlu0 %1103
  %v1106 = vsel %vm140, %v1104, 0
  %1108 = vmatpush.bf16.msra.mxu0 0
  %1109 = vmatpush.bf16.msra.mxu0 0
  %1110 = vmatpush.bf16.msra.mxu0 0
  %1111 = vmatpush.bf16.msra.mxu0 0
  %1112 = vmatpush.bf16.msra.mxu0 0
  %1113 = vmatpush.bf16.msra.mxu0 0
  %1114 = vmatpush.bf16.msra.mxu0 %v869
  %1115 = vmatpush.bf16.msra.mxu0 %v868
  %1116 = vmatmul.bf16.gmra.mxu0 %v1106
  %v1117 = vpop.f32.mrf.mxu0
  %v1118 = vadd.f32 0.0, %v1117
  %v1119 = vpop.f32.mrf.mxu0
  %1120 = vdwg.mxu0
  %v1121 = vadd.f32 %v1100, %v1118
  %v1122 = vxor.u32 %v1121, 2147483648
  %v1123 = vmul.f32 %v1122, 1.442695
  %v1124 = vpow.pop %v1123
  %v1125 = vadd.f32 %v1124, 1.0
  %v1126 = vrcp.pop %v1125
  %v1127 = vmul.f32 %v1125, %v1126
  %v1128 = vsub.f32 1.0, %v1127
  %v1129 = vmul.f32 %v1126, %v1128
  %v1130 = vadd.f32 %v1126, %v1129
  %vm1131 = vweird.f32 %v1125
  %vm1132 = vweird.f32 %v1126
  %vm1133 = vmor %vm1131, %vm1132
  %v1134 = vsel %vm1133, %v1126, %v1130
  %v1135 = vand.u32 2147483647, %v1125
  %vm1136 = vcmp.eq.f32.partialorder %v1135, 8.507059e+37
  %v1137 = vand.u32 %v1125, 2147483648
  %v1138 = vor.u32 1.1754944e-38, %v1137
  %v1139 = vsel %vm1136, %v1138, %v1134
  %v1140 = vmul.f32 1.0, %v1139
  %v1141 = vtanh.pop %v1121
  %v1142 = vmul.f32 %v1140, %v1093
  %1144 = vrot.lane.b32.xlu0 %v1141, 32
  %v1145 = vpop.permute.xlu0 %1144
  %v1147 = vmul.f32 %v1140, %v1145
  %1149 = vrot.lane.b32.xlu0 %v1147, 32
  %v1150 = vpop.permute.xlu0 %1149
  %v1152 = vadd.f32 %v1142, %v1150
  %v1153 = vtanh.pop %v1152
  %1155 = vrot.lane.b32.xlu0 %v1153, 32
  %v1156 = vpop.permute.xlu0 %1155
  %v1158 = vmul.f32 %v1140, %v1156
  %v1159 = vld [vmem:[%s528] sm:$0xff]
  %v1160 = vpack.c.bf16 %v1158, %v1158
  %1162 = vrot.lane.b32.xlu0 %v1160, 64
  %v1163 = vpop.permute.xlu0 %1162
  %v1165 = vsel %vm140, %v1163, 0
  %1167 = vmatpush.bf16.msra.mxu0 0
  %1168 = vmatpush.bf16.msra.mxu0 0
  %1169 = vmatpush.bf16.msra.mxu0 0
  %1170 = vmatpush.bf16.msra.mxu0 0
  %1171 = vmatpush.bf16.msra.mxu0 0
  %1172 = vmatpush.bf16.msra.mxu0 0
  %1173 = vmatpush.bf16.msra.mxu0 %v869
  %1174 = vmatpush.bf16.msra.mxu0 %v868
  %1175 = vmatmul.bf16.gmra.mxu0 %v1165
  %v1176 = vpop.f32.mrf.mxu0
  %v1177 = vadd.f32 0.0, %v1176
  %v1178 = vpop.f32.mrf.mxu0
  %1179 = vdwg.mxu0
  %v1180 = vadd.f32 %v1159, %v1177
  %v1181 = vxor.u32 %v1180, 2147483648
  %v1182 = vmul.f32 %v1181, 1.442695
  %v1183 = vpow.pop %v1182
  %v1184 = vadd.f32 %v1183, 1.0
  %v1185 = vrcp.pop %v1184
  %v1186 = vmul.f32 %v1184, %v1185
  %v1187 = vsub.f32 1.0, %v1186
  %v1188 = vmul.f32 %v1185, %v1187
  %v1189 = vadd.f32 %v1185, %v1188
  %vm1190 = vweird.f32 %v1184
  %vm1191 = vweird.f32 %v1185
  %vm1192 = vmor %vm1190, %vm1191
  %v1193 = vsel %vm1192, %v1185, %v1189
  %v1194 = vand.u32 2147483647, %v1184
  %vm1195 = vcmp.eq.f32.partialorder %v1194, 8.507059e+37
  %v1196 = vand.u32 %v1184, 2147483648
  %v1197 = vor.u32 1.1754944e-38, %v1196
  %v1198 = vsel %vm1195, %v1197, %v1193
  %v1199 = vmul.f32 1.0, %v1198
  %v1200 = vtanh.pop %v1180
  %v1201 = vmul.f32 %v1199, %v1152
  %1203 = vrot.lane.b32.xlu0 %v1200, 32
  %v1204 = vpop.permute.xlu0 %1203
  %v1206 = vmul.f32 %v1199, %v1204
  %1208 = vrot.lane.b32.xlu0 %v1206, 32
  %v1209 = vpop.permute.xlu0 %1208
  %v1211 = vadd.f32 %v1201, %v1209
  %v1212 = vtanh.pop %v1211
  %1214 = vrot.lane.b32.xlu0 %v1212, 32
  %v1215 = vpop.permute.xlu0 %1214
  %v1217 = vmul.f32 %v1199, %v1215
  %v1218 = vld [vmem:[%s610] sm:$0xff]
  %v1219 = vpack.c.bf16 %v1217, %v1217
  %1221 = vrot.lane.b32.xlu0 %v1219, 64
  %v1222 = vpop.permute.xlu0 %1221
  %v1224 = vsel %vm140, %v1222, 0
  %1226 = vmatpush.bf16.msra.mxu0 0
  %1227 = vmatpush.bf16.msra.mxu0 0
  %1228 = vmatpush.bf16.msra.mxu0 0
  %1229 = vmatpush.bf16.msra.mxu0 0
  %1230 = vmatpush.bf16.msra.mxu0 0
  %1231 = vmatpush.bf16.msra.mxu0 0
  %1232 = vmatpush.bf16.msra.mxu0 %v869
  %1233 = vmatpush.bf16.msra.mxu0 %v868
  %1234 = vmatmul.bf16.gmra.mxu0 %v1224
  %v1235 = vpop.f32.mrf.mxu0
  %v1236 = vadd.f32 0.0, %v1235
  %v1237 = vpop.f32.mrf.mxu0
  %1238 = vdwg.mxu0
  %v1239 = vadd.f32 %v1218, %v1236
  %v1240 = vxor.u32 %v1239, 2147483648
  %v1241 = vmul.f32 %v1240, 1.442695
  %v1242 = vpow.pop %v1241
  %v1243 = vadd.f32 %v1242, 1.0
  %v1244 = vrcp.pop %v1243
  %v1245 = vmul.f32 %v1243, %v1244
  %v1246 = vsub.f32 1.0, %v1245
  %v1247 = vmul.f32 %v1244, %v1246
  %v1248 = vadd.f32 %v1244, %v1247
  %vm1249 = vweird.f32 %v1243
  %vm1250 = vweird.f32 %v1244
  %vm1251 = vmor %vm1249, %vm1250
  %v1252 = vsel %vm1251, %v1244, %v1248
  %v1253 = vand.u32 2147483647, %v1243
  %vm1254 = vcmp.eq.f32.partialorder %v1253, 8.507059e+37
  %v1255 = vand.u32 %v1243, 2147483648
  %v1256 = vor.u32 1.1754944e-38, %v1255
  %v1257 = vsel %vm1254, %v1256, %v1252
  %v1258 = vmul.f32 1.0, %v1257
  %v1259 = vtanh.pop %v1239
  %v1260 = vmul.f32 %v1258, %v1211
  %1262 = vrot.lane.b32.xlu0 %v1259, 32
  %v1263 = vpop.permute.xlu0 %1262
  %v1265 = vmul.f32 %v1258, %v1263
  %1267 = vrot.lane.b32.xlu0 %v1265, 32
  %v1268 = vpop.permute.xlu0 %1267
  %v1270 = vadd.f32 %v1260, %v1268
  %v1271 = vtanh.pop %v1270
  %1273 = vrot.lane.b32.xlu0 %v1271, 32
  %v1274 = vpop.permute.xlu0 %1273
  %v1276 = vmul.f32 %v1258, %v1274
  %v1277 = vld [vmem:[%s692] sm:$0xff]
  %v1278 = vpack.c.bf16 %v1276, %v1276
  %1280 = vrot.lane.b32.xlu0 %v1278, 64
  %v1281 = vpop.permute.xlu0 %1280
  %v1283 = vsel %vm140, %v1281, 0
  %1285 = vmatpush.bf16.msra.mxu0 0
  %1286 = vmatpush.bf16.msra.mxu0 0
  %1287 = vmatpush.bf16.msra.mxu0 0
  %1288 = vmatpush.bf16.msra.mxu0 0
  %1289 = vmatpush.bf16.msra.mxu0 0
  %1290 = vmatpush.bf16.msra.mxu0 0
  %1291 = vmatpush.bf16.msra.mxu0 %v869
  %1292 = vmatpush.bf16.msra.mxu0 %v868
  %1293 = vmatmul.bf16.gmra.mxu0 %v1283
  %v1294 = vpop.f32.mrf.mxu0
  %v1295 = vadd.f32 0.0, %v1294
  %v1296 = vpop.f32.mrf.mxu0
  %1297 = vdwg.mxu0
  %v1298 = vadd.f32 %v1277, %v1295
  %v1299 = vxor.u32 %v1298, 2147483648
  %v1300 = vmul.f32 %v1299, 1.442695
  %v1301 = vpow.pop %v1300
  %v1302 = vadd.f32 %v1301, 1.0
  %v1303 = vrcp.pop %v1302
  %v1304 = vmul.f32 %v1302, %v1303
  %v1305 = vsub.f32 1.0, %v1304
  %v1306 = vmul.f32 %v1303, %v1305
  %v1307 = vadd.f32 %v1303, %v1306
  %vm1308 = vweird.f32 %v1302
  %vm1309 = vweird.f32 %v1303
  %vm1310 = vmor %vm1308, %vm1309
  %v1311 = vsel %vm1310, %v1303, %v1307
  %v1312 = vand.u32 2147483647, %v1302
  %vm1313 = vcmp.eq.f32.partialorder %v1312, 8.507059e+37
  %v1314 = vand.u32 %v1302, 2147483648
  %v1315 = vor.u32 1.1754944e-38, %v1314
  %v1316 = vsel %vm1313, %v1315, %v1311
  %v1317 = vmul.f32 1.0, %v1316
  %v1318 = vtanh.pop %v1298
  %v1319 = vmul.f32 %v1317, %v1270
  %1321 = vrot.lane.b32.xlu0 %v1318, 32
  %v1322 = vpop.permute.xlu0 %1321
  %v1324 = vmul.f32 %v1317, %v1322
  %1326 = vrot.lane.b32.xlu0 %v1324, 32
  %v1327 = vpop.permute.xlu0 %1326
  %v1329 = vadd.f32 %v1319, %v1327
  %v1330 = vtanh.pop %v1329
  %1332 = vrot.lane.b32.xlu0 %v1330, 32
  %v1333 = vpop.permute.xlu0 %1332
  %v1335 = vmul.f32 %v1317, %v1333
  %v1336 = vpack.c.bf16 %v1335, %v1335
  %v1337 = vld [vmem:[%s7] sm:$0xf]
  %v1338 = vld [vmem:[%s7 + $0x4] sm:$0xf]
  %v1339 = vld [vmem:[%s7 + $0x8] sm:$0xf]
  %v1340 = vld [vmem:[%s7 + $0xc] sm:$0xf]
  %v1341 = vld [vmem:[%s8] sm:$0x1]
  %v1343 = vperm.slane %v1341, 0
  %1346 = vrot.lane.b32.xlu0 %v1336, 64
  %v1347 = vpop.permute.xlu0 %1346
  %v1352 = vunpack.c.l.b16 %v1337
  %v1353 = vunpack.c.l.b16 %v1338
  %v1354 = vunpack.c.l.b16 %v1339
  %v1355 = vunpack.c.l.b16 %v1340
  %v1356 = vpack.c.b16 %v1353, %v1352
  %v1357 = vpack.c.b16 %v1355, %v1354
  %v1361 = vsel %vm140, %v1347, 0
  %1363 = vmatpush.bf16.msra.mxu0 0
  %1364 = vmatpush.bf16.msra.mxu0 0
  %1365 = vmatpush.bf16.msra.mxu0 0
  %1366 = vmatpush.bf16.msra.mxu0 0
  %1367 = vmatpush.bf16.msra.mxu0 0
  %1368 = vmatpush.bf16.msra.mxu0 0
  %1369 = vmatpush.bf16.msra.mxu0 %v1357
  %1370 = vmatpush.bf16.msra.mxu0 %v1356
  %1371 = vmatmul.bf16.gmra.mxu0 %v1361
  %v1372 = vpop.f32.mrf.mxu0
  %v1373 = vadd.f32 %v1343, %v1372
  %v1374 = vpop.f32.mrf.mxu0
  %1375 = vdwg.mxu0
  %vm1376 = vcmask 31744
  %1377 = vst.msk [vmem:[%s9] sm:$0xff] %vm1376, %v1373
  // Predicated region
  $region38: #{a_call__.1} parent=0 // pred_check
    _
  $region39: #{a_call__.1} parent=0 // pred_check_branch
    %1379 = sbr.rel (0) target = $region41
  $region40: #{a_call__.1} parent=0 // pred_region
    _
  $region41: #{a_call__.1} parent=0 // pred_fallthru
    _
  // Predicated region
  $region42: #{a_call__.1} parent=0 // pred_check
    _
  $region43: #{a_call__.1} parent=0 // pred_check_branch
    %1381 = sbr.rel (0) target = $region45
  $region44: #{a_call__.1} parent=0 // pred_region
    _
  $region45: #{a_call__.1} parent=0 // pred_fallthru
    _

</llo_original>
